<compile_context>
chip_gen: v7x
topology: tpu7x:2x2x1
jax: 0.10.0
libtpu: 0.0.40
codegen_flags: <defaults>
</compile_context>

<pallas_src>
import functools

import jax
import jax.numpy as jnp
from jax.experimental import pallas as pl
from jax.experimental.pallas import tpu as pltpu


def _round_up(x, m):
    return (x + m - 1) // m * m


def _pad_to(x, shape):
    pads = [(0, t - s) for s, t in zip(x.shape, shape)]
    if all(p == (0, 0) for p in pads):
        return x
    return jnp.pad(x, pads)


def _choose_batch_tile(B):
    """Batch tile rounded to 16 sublanes (bf16 latent/logits tiles).

    For B large enough we target an even number of >=2 tiles so the two
    TensorCores on v7x both get work, with <=512 rows per tile.
    """
    if B <= 32:
        return _round_up(B, 16)
    n_tiles = max(2, pl.cdiv(B, 512))
    if n_tiles % 2:
        n_tiles += 1
    return _round_up(pl.cdiv(B, n_tiles), 16)


def _actor_kernel(latent_ref,
                  w1_ref, b1_ref, g1_ref, be1_ref,
                  w2_ref, b2_ref, g2_ref, be2_ref,
                  w3_ref, b3_ref,
                  out_ref, *, hidden_true):
    # latent_ref is already bf16 (cast in the wrapper), so it feeds the MXU
    # directly; accumulation stays in f32.
    def dense(h_bf16, w_ref, b_ref):
        return jnp.dot(h_bf16, w_ref[...],
                       preferred_element_type=jnp.float32) + b_ref[...]

    def layernorm(h, g_ref, be_ref, eps=1e-5):
        # Padded feature columns of `h` are exactly zero (padded weight
        # columns / biases are zero), so the sums over the padded width equal
        # the sums over the true width; normalize by the true width only.
        n = float(hidden_true)
        s1 = jnp.sum(h, axis=-1, keepdims=True)
        s2 = jnp.sum(h * h, axis=-1, keepdims=True)     # one pass for both stats
        mu = s1 / n
        var = jnp.maximum(s2 / n - mu * mu, 0.0)        # clamp cancellation error
        inv = jax.lax.rsqrt(var + eps)
        # gamma/beta are zero on padded columns -> padded outputs stay 0.
        return (h - mu) * inv * g_ref[...] + be_ref[...]

    def silu_bf16(h):
        # sigmoid exp/recip run on the EUP slot; cast to bf16 right away so
        # the next matmul input and its VMEM footprint are half-width.
        return (h * jax.nn.sigmoid(h)).astype(jnp.bfloat16)

    x = latent_ref[...]
    h = silu_bf16(layernorm(dense(x, w1_ref, b1_ref), g1_ref, be1_ref))
    h = silu_bf16(layernorm(dense(h, w2_ref, b2_ref), g2_ref, be2_ref))
    out_ref[...] = dense(h, w3_ref, b3_ref).astype(out_ref.dtype)


def init_actor_params(key, latent_size, hidden_size, action_size):
    ks = jax.random.split(key, 3)
    scale = 0.02

    def lin(k, fan_in, fan_out):
        w = (scale * jax.random.normal(k, (fan_in, fan_out),
                                       dtype=jnp.float32)).astype(jnp.bfloat16)
        b = jnp.zeros((1, fan_out), dtype=jnp.float32)
        return w, b

    w1, b1 = lin(ks[0], latent_size, hidden_size)
    w2, b2 = lin(ks[1], hidden_size, hidden_size)
    w3, b3 = lin(ks[2], hidden_size, action_size)
    g1 = jnp.ones((1, hidden_size), dtype=jnp.float32)
    be1 = jnp.zeros((1, hidden_size), dtype=jnp.float32)
    g2 = jnp.ones((1, hidden_size), dtype=jnp.float32)
    be2 = jnp.zeros((1, hidden_size), dtype=jnp.float32)
    return dict(w1=w1, b1=b1, g1=g1, be1=be1,
                w2=w2, b2=b2, g2=g2, be2=be2,
                w3=w3, b3=b3)


def actor_forward(latent, params, out_dtype=jnp.bfloat16):
    B, L = latent.shape
    H = params["w1"].shape[1]
    A = params["w3"].shape[1]
    out_dtype = jnp.dtype(out_dtype)

    # Lane-dense padding of the feature dims; adaptive batch tile.
    Lp = _round_up(L, 128)
    Hp = _round_up(H, 128)
    Ap = _round_up(A, 128)
    TB = _choose_batch_tile(B)
    Bp = _round_up(B, TB)
    grid = (Bp // TB,)

    # bf16 cast happens inside the padding copy that is materialized anyway.
    lat_p = _pad_to(latent.astype(jnp.bfloat16), (Bp, Lp))
    w1 = _pad_to(params["w1"].astype(jnp.bfloat16), (Lp, Hp))
    b1 = _pad_to(params["b1"].astype(jnp.float32), (1, Hp))
    g1 = _pad_to(params["g1"].astype(jnp.float32), (1, Hp))
    be1 = _pad_to(params["be1"].astype(jnp.float32), (1, Hp))
    w2 = _pad_to(params["w2"].astype(jnp.bfloat16), (Hp, Hp))
    b2 = _pad_to(params["b2"].astype(jnp.float32), (1, Hp))
    g2 = _pad_to(params["g2"].astype(jnp.float32), (1, Hp))
    be2 = _pad_to(params["be2"].astype(jnp.float32), (1, Hp))
    w3 = _pad_to(params["w3"].astype(jnp.bfloat16), (Hp, Ap))
    b3 = _pad_to(params["b3"].astype(jnp.float32), (1, Ap))

    kernel = functools.partial(_actor_kernel, hidden_true=H)

    # Cost estimate for XLA scheduling around the custom call.
    flops = 2 * Bp * (Lp * Hp + Hp * Hp + Hp * Ap)
    # two SiLU layers: exp + reciprocal per element, plus two rsqrt per row.
    transcendentals = 4 * Bp * Hp + 2 * Bp
    weight_bytes = (w1.size + w2.size + w3.size) * 2
    small_bytes = (b1.size + g1.size + be1.size
                   + b2.size + g2.size + be2.size + b3.size) * 4
    bytes_accessed = (lat_p.size * 2
                      + weight_bytes + small_bytes
                      + Bp * Ap * out_dtype.itemsize)
    cost = pl.CostEstimate(flops=flops, transcendentals=transcendentals,
                           bytes_accessed=bytes_accessed)

    # VMEM budget: (worst case double-buffered) resident params +
    # double-buffered I/O tiles + a few f32 (TB,Hp) intermediates inside the
    # body. Cap at the physical device VMEM minus headroom (never >64 MiB on
    # v7x).
    try:
        vmem_cap = int(getattr(pltpu.get_tpu_info(), "vmem_capacity_bytes",
                               64 << 20))
    except Exception:
        vmem_cap = 64 << 20
    io_bytes = 2 * (TB * Lp * 2 + TB * Ap * out_dtype.itemsize)
    scratch_bytes = 6 * TB * Hp * 4
    vmem_need = 2 * (weight_bytes + small_bytes) + io_bytes + scratch_bytes + (4 << 20)
    vmem_limit = int(min(max(vmem_need, 32 << 20), vmem_cap - (8 << 20)))

    compiler_params = pltpu.CompilerParams(
        # "parallel" lets megacore / dual-TC chips shard the batch grid.
        dimension_semantics=("parallel",),
        vmem_limit_bytes=vmem_limit)

    args = (lat_p, w1, b1, g1, be1, w2, b2, g2, be2, w3, b3)

    def build_and_run(weight_pipeline_mode):
        extra = ({} if weight_pipeline_mode is None
                 else {"pipeline_mode": weight_pipeline_mode})

        def wspec(shape):
            # Constant index_map: block is resident across the whole grid.
            return pl.BlockSpec(shape, lambda i: (0, 0), **extra)

        call = pl.pallas_call(
            kernel,
            out_shape=jax.ShapeDtypeStruct((Bp, Ap), out_dtype),
            grid=grid,
            in_specs=[
                pl.BlockSpec((TB, Lp), lambda i: (i, 0)),      # latent tile
                wspec((Lp, Hp)), wspec((1, Hp)), wspec((1, Hp)), wspec((1, Hp)),
                wspec((Hp, Hp)), wspec((1, Hp)), wspec((1, Hp)), wspec((1, Hp)),
                wspec((Hp, Ap)), wspec((1, Ap)),
            ],
            out_specs=pl.BlockSpec((TB, Ap), lambda i: (i, 0)),
            compiler_params=compiler_params,
            cost_estimate=cost,
        )
        return call(*args)

    try:
        # Single-buffer the revisited (constant-index) params: the second
        # pipeline buffer would be dead VMEM.
        out_p = build_and_run(pl.Buffered(1))
    except Exception:
        # TODO(synk): this JAX build rejects pipeline_mode / Buffered(1);
        # fall back to default double-buffered params (correct, more VMEM).
        out_p = build_and_run(None)

    return out_p[:B, :A]


def _reference_forward(latent, p):
    # Pure-JAX reference mirroring the kernel's bf16-matmul / f32-accumulate /
    # bf16-activation numerics at the original (unpadded) sizes.
    def dense(h, w, b):
        return jnp.dot(h.astype(jnp.bfloat16), w.astype(jnp.bfloat16),
                       preferred_element_type=jnp.float32) + b.astype(jnp.float32)

    def layernorm(h, g, be, eps=1e-5):
        mu = jnp.mean(h, axis=-1, keepdims=True)
        var = jnp.mean((h - mu) ** 2, axis=-1, keepdims=True)
        return (h - mu) * jax.lax.rsqrt(var + eps) * g + be

    def silu(h):
        return h * jax.nn.sigmoid(h)

    h = silu(layernorm(dense(latent, p["w1"], p["b1"]),
                       p["g1"], p["be1"])).astype(jnp.bfloat16)
    h = silu(layernorm(dense(h, p["w2"], p["b2"]),
                       p["g2"], p["be2"])).astype(jnp.bfloat16)
    return dense(h, p["w3"], p["b3"])


if __name__ == "__main__":
    key = jax.random.PRNGKey(0)
    k_lat, k_par = jax.random.split(key)

    batch = 2
    latent_size = 32
    hidden_size = 32
    action_size = 8

    latent = jax.random.normal(k_lat, (batch, latent_size), dtype=jnp.float32)
    params = init_actor_params(k_par, latent_size, hidden_size, action_size)

    logits = actor_forward(latent, params)          # bf16 logits by default
    logits = jax.block_until_ready(logits)

    ref = _reference_forward(latent, params)
    assert logits.shape == (batch, action_size)
    assert jnp.allclose(logits.astype(jnp.float32), ref,
                        atol=5e-3, rtol=2e-2), "mismatch vs reference"

    print("KERNEL_OK")
</pallas_src>

<mosaic_0001>
module attributes {stable_mosaic.version = 11 : i64} {
  func.func @_actor_kernel(%arg0: i32, %arg1: memref<16x128xbf16, #tpu.memory_space<vmem>>, %arg2: memref<128x128xbf16, #tpu.memory_space<vmem>>, %arg3: memref<1x128xf32, #tpu.memory_space<vmem>>, %arg4: memref<1x128xf32, #tpu.memory_space<vmem>>, %arg5: memref<1x128xf32, #tpu.memory_space<vmem>>, %arg6: memref<128x128xbf16, #tpu.memory_space<vmem>>, %arg7: memref<1x128xf32, #tpu.memory_space<vmem>>, %arg8: memref<1x128xf32, #tpu.memory_space<vmem>>, %arg9: memref<1x128xf32, #tpu.memory_space<vmem>>, %arg10: memref<128x128xbf16, #tpu.memory_space<vmem>>, %arg11: memref<1x128xf32, #tpu.memory_space<vmem>>, %arg12: memref<16x128xbf16, #tpu.memory_space<vmem>>) attributes {dimension_semantics = [#tpu.dimension_semantics<parallel>], iteration_bounds = array<i64: 1>, scalar_prefetch = 0 : i64, scratch_operands = 0 : i64, tpu.core_type = #tpu.core_type<tc>, window_params = [{transform_indices = @transform_0, window_bounds = array<i64: 16, 128>}, {pipeline_mode = #tpu.pipeline_mode<synchronous>, transform_indices = @transform_1, window_bounds = array<i64: 128, 128>}, {pipeline_mode = #tpu.pipeline_mode<synchronous>, transform_indices = @transform_2, window_bounds = array<i64: 1, 128>}, {pipeline_mode = #tpu.pipeline_mode<synchronous>, transform_indices = @transform_3, window_bounds = array<i64: 1, 128>}, {pipeline_mode = #tpu.pipeline_mode<synchronous>, transform_indices = @transform_4, window_bounds = array<i64: 1, 128>}, {pipeline_mode = #tpu.pipeline_mode<synchronous>, transform_indices = @transform_5, window_bounds = array<i64: 128, 128>}, {pipeline_mode = #tpu.pipeline_mode<synchronous>, transform_indices = @transform_6, window_bounds = array<i64: 1, 128>}, {pipeline_mode = #tpu.pipeline_mode<synchronous>, transform_indices = @transform_7, window_bounds = array<i64: 1, 128>}, {pipeline_mode = #tpu.pipeline_mode<synchronous>, transform_indices = @transform_8, window_bounds = array<i64: 1, 128>}, {pipeline_mode = #tpu.pipeline_mode<synchronous>, transform_indices = @transform_9, window_bounds = array<i64: 128, 128>}, {pipeline_mode = #tpu.pipeline_mode<synchronous>, transform_indices = @transform_10, window_bounds = array<i64: 1, 128>}, {transform_indices = @transform_11, window_bounds = array<i64: 16, 128>}]} {
    %c0 = arith.constant 0 : index
    %c0_0 = arith.constant 0 : index
    %0 = vector.load %arg1[%c0, %c0_0] : memref<16x128xbf16, #tpu.memory_space<vmem>>, vector<16x128xbf16>
    %c0_1 = arith.constant 0 : index
    %c0_2 = arith.constant 0 : index
    %1 = vector.load %arg2[%c0_1, %c0_2] : memref<128x128xbf16, #tpu.memory_space<vmem>>, vector<128x128xbf16>
    %cst = arith.constant dense<0.000000e+00> : vector<16x128xf32>
    %2 = tpu.matmul %0, %1, %cst {dimension_numbers = #tpu.dot_dimension_numbers<[1], [0], [0], [1], [0, 0, 1, 1], [], []>} : vector<16x128xbf16>, vector<128x128xbf16>, vector<16x128xf32> -> vector<16x128xf32>
    %c0_3 = arith.constant 0 : index
    %c0_4 = arith.constant 0 : index
    %3 = vector.load %arg3[%c0_3, %c0_4] : memref<1x128xf32, #tpu.memory_space<vmem>>, vector<1x128xf32>
    %4 = vector.broadcast %3 : vector<1x128xf32> to vector<16x128xf32>
    %5 = arith.addf %2, %4 : vector<16x128xf32>
    %cst_5 = arith.constant dense<0.000000e+00> : vector<16xf32>
    %6 = vector.multi_reduction <add>, %5, %cst_5 [1] : vector<16x128xf32> to vector<16xf32>
    %7 = vector.shape_cast %6 : vector<16xf32> to vector<16x1xf32>
    %8 = arith.mulf %5, %5 : vector<16x128xf32>
    %cst_6 = arith.constant dense<0.000000e+00> : vector<16xf32>
    %9 = vector.multi_reduction <add>, %8, %cst_6 [1] : vector<16x128xf32> to vector<16xf32>
    %10 = vector.shape_cast %9 : vector<16xf32> to vector<16x1xf32>
    %cst_7 = arith.constant 3.200000e+01 : f32
    %11 = vector.broadcast %cst_7 : f32 to vector<16x1xf32>
    %12 = arith.divf %7, %11 : vector<16x1xf32>
    %cst_8 = arith.constant 3.200000e+01 : f32
    %13 = vector.broadcast %cst_8 : f32 to vector<16x1xf32>
    %14 = arith.divf %10, %13 : vector<16x1xf32>
    %15 = arith.mulf %12, %12 : vector<16x1xf32>
    %16 = arith.subf %14, %15 : vector<16x1xf32>
    %cst_9 = arith.constant 0.000000e+00 : f32
    %17 = vector.broadcast %cst_9 : f32 to vector<16x1xf32>
    %18 = arith.maximumf %16, %17 : vector<16x1xf32>
    %cst_10 = arith.constant 9.99999974E-6 : f32
    %19 = vector.broadcast %cst_10 : f32 to vector<16x1xf32>
    %20 = arith.addf %18, %19 : vector<16x1xf32>
    %21 = math.rsqrt %20 : vector<16x1xf32>
    %22 = vector.broadcast %12 : vector<16x1xf32> to vector<16x128xf32>
    %23 = arith.subf %5, %22 : vector<16x128xf32>
    %24 = vector.broadcast %21 : vector<16x1xf32> to vector<16x128xf32>
    %25 = arith.mulf %23, %24 : vector<16x128xf32>
    %c0_11 = arith.constant 0 : index
    %c0_12 = arith.constant 0 : index
    %26 = vector.load %arg4[%c0_11, %c0_12] : memref<1x128xf32, #tpu.memory_space<vmem>>, vector<1x128xf32>
    %27 = vector.broadcast %26 : vector<1x128xf32> to vector<16x128xf32>
    %28 = arith.mulf %25, %27 : vector<16x128xf32>
    %c0_13 = arith.constant 0 : index
    %c0_14 = arith.constant 0 : index
    %29 = vector.load %arg5[%c0_13, %c0_14] : memref<1x128xf32, #tpu.memory_space<vmem>>, vector<1x128xf32>
    %30 = vector.broadcast %29 : vector<1x128xf32> to vector<16x128xf32>
    %31 = arith.addf %28, %30 : vector<16x128xf32>
    %32 = arith.negf %31 : vector<16x128xf32>
    %33 = math.exp %32 : vector<16x128xf32>
    %cst_15 = arith.constant 1.000000e+00 : f32
    %34 = vector.broadcast %cst_15 : f32 to vector<16x128xf32>
    %35 = arith.addf %34, %33 : vector<16x128xf32>
    %36 = arith.divf %34, %35 : vector<16x128xf32>
    %37 = arith.mulf %31, %36 : vector<16x128xf32>
    %38 = arith.truncf %37 : vector<16x128xf32> to vector<16x128xbf16>
    %c0_16 = arith.constant 0 : index
    %c0_17 = arith.constant 0 : index
    %39 = vector.load %arg6[%c0_16, %c0_17] : memref<128x128xbf16, #tpu.memory_space<vmem>>, vector<128x128xbf16>
    %cst_18 = arith.constant dense<0.000000e+00> : vector<16x128xf32>
    %40 = tpu.matmul %38, %39, %cst_18 {dimension_numbers = #tpu.dot_dimension_numbers<[1], [0], [0], [1], [0, 0, 1, 1], [], []>} : vector<16x128xbf16>, vector<128x128xbf16>, vector<16x128xf32> -> vector<16x128xf32>
    %c0_19 = arith.constant 0 : index
    %c0_20 = arith.constant 0 : index
    %41 = vector.load %arg7[%c0_19, %c0_20] : memref<1x128xf32, #tpu.memory_space<vmem>>, vector<1x128xf32>
    %42 = vector.broadcast %41 : vector<1x128xf32> to vector<16x128xf32>
    %43 = arith.addf %40, %42 : vector<16x128xf32>
    %cst_21 = arith.constant dense<0.000000e+00> : vector<16xf32>
    %44 = vector.multi_reduction <add>, %43, %cst_21 [1] : vector<16x128xf32> to vector<16xf32>
    %45 = vector.shape_cast %44 : vector<16xf32> to vector<16x1xf32>
    %46 = arith.mulf %43, %43 : vector<16x128xf32>
    %cst_22 = arith.constant dense<0.000000e+00> : vector<16xf32>
    %47 = vector.multi_reduction <add>, %46, %cst_22 [1] : vector<16x128xf32> to vector<16xf32>
    %48 = vector.shape_cast %47 : vector<16xf32> to vector<16x1xf32>
    %cst_23 = arith.constant 3.200000e+01 : f32
    %49 = vector.broadcast %cst_23 : f32 to vector<16x1xf32>
    %50 = arith.divf %45, %49 : vector<16x1xf32>
    %cst_24 = arith.constant 3.200000e+01 : f32
    %51 = vector.broadcast %cst_24 : f32 to vector<16x1xf32>
    %52 = arith.divf %48, %51 : vector<16x1xf32>
    %53 = arith.mulf %50, %50 : vector<16x1xf32>
    %54 = arith.subf %52, %53 : vector<16x1xf32>
    %cst_25 = arith.constant 0.000000e+00 : f32
    %55 = vector.broadcast %cst_25 : f32 to vector<16x1xf32>
    %56 = arith.maximumf %54, %55 : vector<16x1xf32>
    %cst_26 = arith.constant 9.99999974E-6 : f32
    %57 = vector.broadcast %cst_26 : f32 to vector<16x1xf32>
    %58 = arith.addf %56, %57 : vector<16x1xf32>
    %59 = math.rsqrt %58 : vector<16x1xf32>
    %60 = vector.broadcast %50 : vector<16x1xf32> to vector<16x128xf32>
    %61 = arith.subf %43, %60 : vector<16x128xf32>
    %62 = vector.broadcast %59 : vector<16x1xf32> to vector<16x128xf32>
    %63 = arith.mulf %61, %62 : vector<16x128xf32>
    %c0_27 = arith.constant 0 : index
    %c0_28 = arith.constant 0 : index
    %64 = vector.load %arg8[%c0_27, %c0_28] : memref<1x128xf32, #tpu.memory_space<vmem>>, vector<1x128xf32>
    %65 = vector.broadcast %64 : vector<1x128xf32> to vector<16x128xf32>
    %66 = arith.mulf %63, %65 : vector<16x128xf32>
    %c0_29 = arith.constant 0 : index
    %c0_30 = arith.constant 0 : index
    %67 = vector.load %arg9[%c0_29, %c0_30] : memref<1x128xf32, #tpu.memory_space<vmem>>, vector<1x128xf32>
    %68 = vector.broadcast %67 : vector<1x128xf32> to vector<16x128xf32>
    %69 = arith.addf %66, %68 : vector<16x128xf32>
    %70 = arith.negf %69 : vector<16x128xf32>
    %71 = math.exp %70 : vector<16x128xf32>
    %cst_31 = arith.constant 1.000000e+00 : f32
    %72 = vector.broadcast %cst_31 : f32 to vector<16x128xf32>
    %73 = arith.addf %72, %71 : vector<16x128xf32>
    %74 = arith.divf %72, %73 : vector<16x128xf32>
    %75 = arith.mulf %69, %74 : vector<16x128xf32>
    %76 = arith.truncf %75 : vector<16x128xf32> to vector<16x128xbf16>
    %c0_32 = arith.constant 0 : index
    %c0_33 = arith.constant 0 : index
    %77 = vector.load %arg10[%c0_32, %c0_33] : memref<128x128xbf16, #tpu.memory_space<vmem>>, vector<128x128xbf16>
    %cst_34 = arith.constant dense<0.000000e+00> : vector<16x128xf32>
    %78 = tpu.matmul %76, %77, %cst_34 {dimension_numbers = #tpu.dot_dimension_numbers<[1], [0], [0], [1], [0, 0, 1, 1], [], []>} : vector<16x128xbf16>, vector<128x128xbf16>, vector<16x128xf32> -> vector<16x128xf32>
    %c0_35 = arith.constant 0 : index
    %c0_36 = arith.constant 0 : index
    %79 = vector.load %arg11[%c0_35, %c0_36] : memref<1x128xf32, #tpu.memory_space<vmem>>, vector<1x128xf32>
    %80 = vector.broadcast %79 : vector<1x128xf32> to vector<16x128xf32>
    %81 = arith.addf %78, %80 : vector<16x128xf32>
    %82 = arith.truncf %81 : vector<16x128xf32> to vector<16x128xbf16>
    %c0_37 = arith.constant 0 : index
    %c0_38 = arith.constant 0 : index
    %83 = vector.load %arg12[%c0_37, %c0_38] : memref<16x128xbf16, #tpu.memory_space<vmem>>, vector<16x128xbf16>
    tpu.vector_store %arg12[%c0_37, %c0_38], %82 {strides = array<i32>} : memref<16x128xbf16, #tpu.memory_space<vmem>>, vector<16x128xbf16>,
    return
  }
  func.func @transform_0(%arg0: i32) -> (i32, i32) {
    %c0_i32 = arith.constant 0 : i32
    %c0_i32_0 = arith.constant 0 : i32
    return %arg0, %c0_i32 : i32, i32
  }
  func.func @transform_1(%arg0: i32) -> (i32, i32) {
    %c0_i32 = arith.constant 0 : i32
    %c0_i32_0 = arith.constant 0 : i32
    %c0_i32_1 = arith.constant 0 : i32
    return %c0_i32, %c0_i32_0 : i32, i32
  }
  func.func @transform_2(%arg0: i32) -> (i32, i32) {
    %c0_i32 = arith.constant 0 : i32
    %c0_i32_0 = arith.constant 0 : i32
    %c0_i32_1 = arith.constant 0 : i32
    return %c0_i32, %c0_i32_0 : i32, i32
  }
  func.func @transform_3(%arg0: i32) -> (i32, i32) {
    %c0_i32 = arith.constant 0 : i32
    %c0_i32_0 = arith.constant 0 : i32
    %c0_i32_1 = arith.constant 0 : i32
    return %c0_i32, %c0_i32_0 : i32, i32
  }
  func.func @transform_4(%arg0: i32) -> (i32, i32) {
    %c0_i32 = arith.constant 0 : i32
    %c0_i32_0 = arith.constant 0 : i32
    %c0_i32_1 = arith.constant 0 : i32
    return %c0_i32, %c0_i32_0 : i32, i32
  }
  func.func @transform_5(%arg0: i32) -> (i32, i32) {
    %c0_i32 = arith.constant 0 : i32
    %c0_i32_0 = arith.constant 0 : i32
    %c0_i32_1 = arith.constant 0 : i32
    return %c0_i32, %c0_i32_0 : i32, i32
  }
  func.func @transform_6(%arg0: i32) -> (i32, i32) {
    %c0_i32 = arith.constant 0 : i32
    %c0_i32_0 = arith.constant 0 : i32
    %c0_i32_1 = arith.constant 0 : i32
    return %c0_i32, %c0_i32_0 : i32, i32
  }
  func.func @transform_7(%arg0: i32) -> (i32, i32) {
    %c0_i32 = arith.constant 0 : i32
    %c0_i32_0 = arith.constant 0 : i32
    %c0_i32_1 = arith.constant 0 : i32
    return %c0_i32, %c0_i32_0 : i32, i32
  }
  func.func @transform_8(%arg0: i32) -> (i32, i32) {
    %c0_i32 = arith.constant 0 : i32
    %c0_i32_0 = arith.constant 0 : i32
    %c0_i32_1 = arith.constant 0 : i32
    return %c0_i32, %c0_i32_0 : i32, i32
  }
  func.func @transform_9(%arg0: i32) -> (i32, i32) {
    %c0_i32 = arith.constant 0 : i32
    %c0_i32_0 = arith.constant 0 : i32
    %c0_i32_1 = arith.constant 0 : i32
    return %c0_i32, %c0_i32_0 : i32, i32
  }
  func.func @transform_10(%arg0: i32) -> (i32, i32) {
    %c0_i32 = arith.constant 0 : i32
    %c0_i32_0 = arith.constant 0 : i32
    %c0_i32_1 = arith.constant 0 : i32
    return %c0_i32, %c0_i32_0 : i32, i32
  }
  func.func @transform_11(%arg0: i32) -> (i32, i32) {
    %c0_i32 = arith.constant 0 : i32
    %c0_i32_0 = arith.constant 0 : i32
    return %arg0, %c0_i32 : i32, i32
  }
}

module attributes {stable_mosaic.version = 11 : i64} {
  func.func @_actor_kernel(%arg0: i32, %arg1: memref<16x128xbf16, #tpu.memory_space<vmem>>, %arg2: memref<128x128xbf16, #tpu.memory_space<vmem>>, %arg3: memref<1x128xf32, #tpu.memory_space<vmem>>, %arg4: memref<1x128xf32, #tpu.memory_space<vmem>>, %arg5: memref<1x128xf32, #tpu.memory_space<vmem>>, %arg6: memref<128x128xbf16, #tpu.memory_space<vmem>>, %arg7: memref<1x128xf32, #tpu.memory_space<vmem>>, %arg8: memref<1x128xf32, #tpu.memory_space<vmem>>, %arg9: memref<1x128xf32, #tpu.memory_space<vmem>>, %arg10: memref<128x128xbf16, #tpu.memory_space<vmem>>, %arg11: memref<1x128xf32, #tpu.memory_space<vmem>>, %arg12: memref<16x128xbf16, #tpu.memory_space<vmem>>) attributes {dimension_semantics = [#tpu.dimension_semantics<parallel>], iteration_bounds = array<i64: 1>, scalar_prefetch = 0 : i64, scratch_operands = 0 : i64, tpu.core_type = #tpu.core_type<tc>, window_params = [{transform_indices = @transform_0, window_bounds = array<i64: 16, 128>}, {pipeline_mode = #tpu.pipeline_mode<synchronous>, transform_indices = @transform_1, window_bounds = array<i64: 128, 128>}, {pipeline_mode = #tpu.pipeline_mode<synchronous>, transform_indices = @transform_2, window_bounds = array<i64: 1, 128>}, {pipeline_mode = #tpu.pipeline_mode<synchronous>, transform_indices = @transform_3, window_bounds = array<i64: 1, 128>}, {pipeline_mode = #tpu.pipeline_mode<synchronous>, transform_indices = @transform_4, window_bounds = array<i64: 1, 128>}, {pipeline_mode = #tpu.pipeline_mode<synchronous>, transform_indices = @transform_5, window_bounds = array<i64: 128, 128>}, {pipeline_mode = #tpu.pipeline_mode<synchronous>, transform_indices = @transform_6, window_bounds = array<i64: 1, 128>}, {pipeline_mode = #tpu.pipeline_mode<synchronous>, transform_indices = @transform_7, window_bounds = array<i64: 1, 128>}, {pipeline_mode = #tpu.pipeline_mode<synchronous>, transform_indices = @transform_8, window_bounds = array<i64: 1, 128>}, {pipeline_mode = #tpu.pipeline_mode<synchronous>, transform_indices = @transform_9, window_bounds = array<i64: 128, 128>}, {pipeline_mode = #tpu.pipeline_mode<synchronous>, transform_indices = @transform_10, window_bounds = array<i64: 1, 128>}, {transform_indices = @transform_11, window_bounds = array<i64: 16, 128>}]} {
    %c0 = arith.constant 0 : index
    %c0_0 = arith.constant 0 : index
    %0 = vector.load %arg1[%c0, %c0_0] : memref<16x128xbf16, #tpu.memory_space<vmem>>, vector<16x128xbf16>
    %c0_1 = arith.constant 0 : index
    %c0_2 = arith.constant 0 : index
    %1 = vector.load %arg2[%c0_1, %c0_2] : memref<128x128xbf16, #tpu.memory_space<vmem>>, vector<128x128xbf16>
    %cst = arith.constant dense<0.000000e+00> : vector<16x128xf32>
    %2 = tpu.matmul %0, %1, %cst {dimension_numbers = #tpu.dot_dimension_numbers<[1], [0], [0], [1], [0, 0, 1, 1], [], []>} : vector<16x128xbf16>, vector<128x128xbf16>, vector<16x128xf32> -> vector<16x128xf32>
    %c0_3 = arith.constant 0 : index
    %c0_4 = arith.constant 0 : index
    %3 = vector.load %arg3[%c0_3, %c0_4] : memref<1x128xf32, #tpu.memory_space<vmem>>, vector<1x128xf32>
    %4 = vector.broadcast %3 : vector<1x128xf32> to vector<16x128xf32>
    %5 = arith.addf %2, %4 : vector<16x128xf32>
    %cst_5 = arith.constant dense<0.000000e+00> : vector<16xf32>
    %6 = vector.multi_reduction <add>, %5, %cst_5 [1] : vector<16x128xf32> to vector<16xf32>
    %7 = vector.shape_cast %6 : vector<16xf32> to vector<16x1xf32>
    %8 = arith.mulf %5, %5 : vector<16x128xf32>
    %cst_6 = arith.constant dense<0.000000e+00> : vector<16xf32>
    %9 = vector.multi_reduction <add>, %8, %cst_6 [1] : vector<16x128xf32> to vector<16xf32>
    %10 = vector.shape_cast %9 : vector<16xf32> to vector<16x1xf32>
    %cst_7 = arith.constant 3.200000e+01 : f32
    %11 = vector.broadcast %cst_7 : f32 to vector<16x1xf32>
    %12 = arith.divf %7, %11 : vector<16x1xf32>
    %cst_8 = arith.constant 3.200000e+01 : f32
    %13 = vector.broadcast %cst_8 : f32 to vector<16x1xf32>
    %14 = arith.divf %10, %13 : vector<16x1xf32>
    %15 = arith.mulf %12, %12 : vector<16x1xf32>
    %16 = arith.subf %14, %15 : vector<16x1xf32>
    %cst_9 = arith.constant 0.000000e+00 : f32
    %17 = vector.broadcast %cst_9 : f32 to vector<16x1xf32>
    %18 = arith.maximumf %16, %17 : vector<16x1xf32>
    %cst_10 = arith.constant 9.99999974E-6 : f32
    %19 = vector.broadcast %cst_10 : f32 to vector<16x1xf32>
    %20 = arith.addf %18, %19 : vector<16x1xf32>
    %21 = math.rsqrt %20 : vector<16x1xf32>
    %22 = vector.broadcast %12 : vector<16x1xf32> to vector<16x128xf32>
    %23 = arith.subf %5, %22 : vector<16x128xf32>
    %24 = vector.broadcast %21 : vector<16x1xf32> to vector<16x128xf32>
    %25 = arith.mulf %23, %24 : vector<16x128xf32>
    %c0_11 = arith.constant 0 : index
    %c0_12 = arith.constant 0 : index
    %26 = vector.load %arg4[%c0_11, %c0_12] : memref<1x128xf32, #tpu.memory_space<vmem>>, vector<1x128xf32>
    %27 = vector.broadcast %26 : vector<1x128xf32> to vector<16x128xf32>
    %28 = arith.mulf %25, %27 : vector<16x128xf32>
    %c0_13 = arith.constant 0 : index
    %c0_14 = arith.constant 0 : index
    %29 = vector.load %arg5[%c0_13, %c0_14] : memref<1x128xf32, #tpu.memory_space<vmem>>, vector<1x128xf32>
    %30 = vector.broadcast %29 : vector<1x128xf32> to vector<16x128xf32>
    %31 = arith.addf %28, %30 : vector<16x128xf32>
    %32 = arith.negf %31 : vector<16x128xf32>
    %33 = math.exp %32 : vector<16x128xf32>
    %cst_15 = arith.constant 1.000000e+00 : f32
    %34 = vector.broadcast %cst_15 : f32 to vector<16x128xf32>
    %35 = arith.addf %34, %33 : vector<16x128xf32>
    %36 = arith.divf %34, %35 : vector<16x128xf32>
    %37 = arith.mulf %31, %36 : vector<16x128xf32>
    %38 = arith.truncf %37 : vector<16x128xf32> to vector<16x128xbf16>
    %c0_16 = arith.constant 0 : index
    %c0_17 = arith.constant 0 : index
    %39 = vector.load %arg6[%c0_16, %c0_17] : memref<128x128xbf16, #tpu.memory_space<vmem>>, vector<128x128xbf16>
    %cst_18 = arith.constant dense<0.000000e+00> : vector<16x128xf32>
    %40 = tpu.matmul %38, %39, %cst_18 {dimension_numbers = #tpu.dot_dimension_numbers<[1], [0], [0], [1], [0, 0, 1, 1], [], []>} : vector<16x128xbf16>, vector<128x128xbf16>, vector<16x128xf32> -> vector<16x128xf32>
    %c0_19 = arith.constant 0 : index
    %c0_20 = arith.constant 0 : index
    %41 = vector.load %arg7[%c0_19, %c0_20] : memref<1x128xf32, #tpu.memory_space<vmem>>, vector<1x128xf32>
    %42 = vector.broadcast %41 : vector<1x128xf32> to vector<16x128xf32>
    %43 = arith.addf %40, %42 : vector<16x128xf32>
    %cst_21 = arith.constant dense<0.000000e+00> : vector<16xf32>
    %44 = vector.multi_reduction <add>, %43, %cst_21 [1] : vector<16x128xf32> to vector<16xf32>
    %45 = vector.shape_cast %44 : vector<16xf32> to vector<16x1xf32>
    %46 = arith.mulf %43, %43 : vector<16x128xf32>
    %cst_22 = arith.constant dense<0.000000e+00> : vector<16xf32>
    %47 = vector.multi_reduction <add>, %46, %cst_22 [1] : vector<16x128xf32> to vector<16xf32>
    %48 = vector.shape_cast %47 : vector<16xf32> to vector<16x1xf32>
    %cst_23 = arith.constant 3.200000e+01 : f32
    %49 = vector.broadcast %cst_23 : f32 to vector<16x1xf32>
    %50 = arith.divf %45, %49 : vector<16x1xf32>
    %cst_24 = arith.constant 3.200000e+01 : f32
    %51 = vector.broadcast %cst_24 : f32 to vector<16x1xf32>
    %52 = arith.divf %48, %51 : vector<16x1xf32>
    %53 = arith.mulf %50, %50 : vector<16x1xf32>
    %54 = arith.subf %52, %53 : vector<16x1xf32>
    %cst_25 = arith.constant 0.000000e+00 : f32
    %55 = vector.broadcast %cst_25 : f32 to vector<16x1xf32>
    %56 = arith.maximumf %54, %55 : vector<16x1xf32>
    %cst_26 = arith.constant 9.99999974E-6 : f32
    %57 = vector.broadcast %cst_26 : f32 to vector<16x1xf32>
    %58 = arith.addf %56, %57 : vector<16x1xf32>
    %59 = math.rsqrt %58 : vector<16x1xf32>
    %60 = vector.broadcast %50 : vector<16x1xf32> to vector<16x128xf32>
    %61 = arith.subf %43, %60 : vector<16x128xf32>
    %62 = vector.broadcast %59 : vector<16x1xf32> to vector<16x128xf32>
    %63 = arith.mulf %61, %62 : vector<16x128xf32>
    %c0_27 = arith.constant 0 : index
    %c0_28 = arith.constant 0 : index
    %64 = vector.load %arg8[%c0_27, %c0_28] : memref<1x128xf32, #tpu.memory_space<vmem>>, vector<1x128xf32>
    %65 = vector.broadcast %64 : vector<1x128xf32> to vector<16x128xf32>
    %66 = arith.mulf %63, %65 : vector<16x128xf32>
    %c0_29 = arith.constant 0 : index
    %c0_30 = arith.constant 0 : index
    %67 = vector.load %arg9[%c0_29, %c0_30] : memref<1x128xf32, #tpu.memory_space<vmem>>, vector<1x128xf32>
    %68 = vector.broadcast %67 : vector<1x128xf32> to vector<16x128xf32>
    %69 = arith.addf %66, %68 : vector<16x128xf32>
    %70 = arith.negf %69 : vector<16x128xf32>
    %71 = math.exp %70 : vector<16x128xf32>
    %cst_31 = arith.constant 1.000000e+00 : f32
    %72 = vector.broadcast %cst_31 : f32 to vector<16x128xf32>
    %73 = arith.addf %72, %71 : vector<16x128xf32>
    %74 = arith.divf %72, %73 : vector<16x128xf32>
    %75 = arith.mulf %69, %74 : vector<16x128xf32>
    %76 = arith.truncf %75 : vector<16x128xf32> to vector<16x128xbf16>
    %c0_32 = arith.constant 0 : index
    %c0_33 = arith.constant 0 : index
    %77 = vector.load %arg10[%c0_32, %c0_33] : memref<128x128xbf16, #tpu.memory_space<vmem>>, vector<128x128xbf16>
    %cst_34 = arith.constant dense<0.000000e+00> : vector<16x128xf32>
    %78 = tpu.matmul %76, %77, %cst_34 {dimension_numbers = #tpu.dot_dimension_numbers<[1], [0], [0], [1], [0, 0, 1, 1], [], []>} : vector<16x128xbf16>, vector<128x128xbf16>, vector<16x128xf32> -> vector<16x128xf32>
    %c0_35 = arith.constant 0 : index
    %c0_36 = arith.constant 0 : index
    %79 = vector.load %arg11[%c0_35, %c0_36] : memref<1x128xf32, #tpu.memory_space<vmem>>, vector<1x128xf32>
    %80 = vector.broadcast %79 : vector<1x128xf32> to vector<16x128xf32>
    %81 = arith.addf %78, %80 : vector<16x128xf32>
    %82 = arith.truncf %81 : vector<16x128xf32> to vector<16x128xbf16>
    %c0_37 = arith.constant 0 : index
    %c0_38 = arith.constant 0 : index
    %83 = vector.load %arg12[%c0_37, %c0_38] : memref<16x128xbf16, #tpu.memory_space<vmem>>, vector<16x128xbf16>
    tpu.vector_store %arg12[%c0_37, %c0_38], %82 {strides = array<i32>} : memref<16x128xbf16, #tpu.memory_space<vmem>>, vector<16x128xbf16>,
    return
  }
  func.func @transform_0(%arg0: i32) -> (i32, i32) {
    %c0_i32 = arith.constant 0 : i32
    %c0_i32_0 = arith.constant 0 : i32
    return %arg0, %c0_i32 : i32, i32
  }
  func.func @transform_1(%arg0: i32) -> (i32, i32) {
    %c0_i32 = arith.constant 0 : i32
    %c0_i32_0 = arith.constant 0 : i32
    %c0_i32_1 = arith.constant 0 : i32
    return %c0_i32, %c0_i32_0 : i32, i32
  }
  func.func @transform_2(%arg0: i32) -> (i32, i32) {
    %c0_i32 = arith.constant 0 : i32
    %c0_i32_0 = arith.constant 0 : i32
    %c0_i32_1 = arith.constant 0 : i32
    return %c0_i32, %c0_i32_0 : i32, i32
  }
  func.func @transform_3(%arg0: i32) -> (i32, i32) {
    %c0_i32 = arith.constant 0 : i32
    %c0_i32_0 = arith.constant 0 : i32
    %c0_i32_1 = arith.constant 0 : i32
    return %c0_i32, %c0_i32_0 : i32, i32
  }
  func.func @transform_4(%arg0: i32) -> (i32, i32) {
    %c0_i32 = arith.constant 0 : i32
    %c0_i32_0 = arith.constant 0 : i32
    %c0_i32_1 = arith.constant 0 : i32
    return %c0_i32, %c0_i32_0 : i32, i32
  }
  func.func @transform_5(%arg0: i32) -> (i32, i32) {
    %c0_i32 = arith.constant 0 : i32
    %c0_i32_0 = arith.constant 0 : i32
    %c0_i32_1 = arith.constant 0 : i32
    return %c0_i32, %c0_i32_0 : i32, i32
  }
  func.func @transform_6(%arg0: i32) -> (i32, i32) {
    %c0_i32 = arith.constant 0 : i32
    %c0_i32_0 = arith.constant 0 : i32
    %c0_i32_1 = arith.constant 0 : i32
    return %c0_i32, %c0_i32_0 : i32, i32
  }
  func.func @transform_7(%arg0: i32) -> (i32, i32) {
    %c0_i32 = arith.constant 0 : i32
    %c0_i32_0 = arith.constant 0 : i32
    %c0_i32_1 = arith.constant 0 : i32
    return %c0_i32, %c0_i32_0 : i32, i32
  }
  func.func @transform_8(%arg0: i32) -> (i32, i32) {
    %c0_i32 = arith.constant 0 : i32
    %c0_i32_0 = arith.constant 0 : i32
    %c0_i32_1 = arith.constant 0 : i32
    return %c0_i32, %c0_i32_0 : i32, i32
  }
  func.func @transform_9(%arg0: i32) -> (i32, i32) {
    %c0_i32 = arith.constant 0 : i32
    %c0_i32_0 = arith.constant 0 : i32
    %c0_i32_1 = arith.constant 0 : i32
    return %c0_i32, %c0_i32_0 : i32, i32
  }
  func.func @transform_10(%arg0: i32) -> (i32, i32) {
    %c0_i32 = arith.constant 0 : i32
    %c0_i32_0 = arith.constant 0 : i32
    %c0_i32_1 = arith.constant 0 : i32
    return %c0_i32, %c0_i32_0 : i32, i32
  }
  func.func @transform_11(%arg0: i32) -> (i32, i32) {
    %c0_i32 = arith.constant 0 : i32
    %c0_i32_0 = arith.constant 0 : i32
    return %arg0, %c0_i32 : i32, i32
  }
}

</mosaic_0001>

<llo_original>
// kernel: tpu_custom_call.1
$region0: #{tpu_custom_call.1}
  #allocation0 [shape = 'u32[]', space=smem, size = 0x4, offset = 0x4, fixed_abs, tag = 'smem constant byte address 0x4 - core index']
  #allocation1 [shape = 'u32[144,128]{1,0:T(1,128)}', space=vmem, size = 0x12000, scoped, tag = 'internal scratch']
  %s0 = inlined_call_operand.hbm [shape: bf16[16,128], index: 0, kind: input, shape index: {}]
  %s1 = inlined_call_operand.hbm [shape: bf16[128,128], index: 1, kind: input, shape index: {}]
  %s2 = inlined_call_operand.vmem [shape: f32[1,128], index: 2, kind: input, shape index: {}]
  %s3 = inlined_call_operand.vmem [shape: f32[1,128], index: 3, kind: input, shape index: {}]
  %s4 = inlined_call_operand.vmem [shape: f32[1,128], index: 4, kind: input, shape index: {}]
  %s5 = inlined_call_operand.hbm [shape: bf16[128,128], index: 5, kind: input, shape index: {}]
  %s6 = inlined_call_operand.vmem [shape: f32[1,128], index: 6, kind: input, shape index: {}]
  %s7 = inlined_call_operand.vmem [shape: f32[1,128], index: 7, kind: input, shape index: {}]
  %s8 = inlined_call_operand.vmem [shape: f32[1,128], index: 8, kind: input, shape index: {}]
  %s9 = inlined_call_operand.hbm [shape: bf16[128,128], index: 9, kind: input, shape index: {}]
  %s10 = inlined_call_operand.vmem [shape: f32[1,128], index: 10, kind: input, shape index: {}]
  %s11 = inlined_call_operand.hbm [shape: bf16[16,128], index: 11, kind: output, shape index: {}]
  %s12 = sld [smem:[#allocation0]]
  $region70: #{tpu_custom_call.1} parent=0
    _
  %s14 = ssub.s32 1, %s12
  %s15 = scalar_select 0, %s14, %s12
  $region1: #{tpu_custom_call.1} parent=0
    #allocation2 [shape = 'u8[4096]{0}', space=vmem, size = 0x1000, scoped, tag = 'input window, operand 0, single buffered']
    #allocation3 [shape = 's32[1]{0}', space=sflag, size = 0x4, scoped, tag = 'scoped memory for tpu_custom_call.1']
    #allocation4 [shape = 's32[1]{0}', space=sflag, size = 0x4, scoped, tag = 'scoped memory for tpu_custom_call.1']
    #allocation5 [shape = 'u8[32768]{0}', space=vmem, size = 0x8000, scoped, tag = 'input window, operand 1, single buffered']
    #allocation6 [shape = 's32[1]{0}', space=sflag, size = 0x4, scoped, tag = 'scoped memory for tpu_custom_call.1']
    #allocation7 [shape = 'u8[32768]{0}', space=vmem, size = 0x8000, scoped, tag = 'input window, operand 5, single buffered']
    #allocation8 [shape = 'u8[32768]{0}', space=vmem, size = 0x8000, scoped, tag = 'input window, operand 9, single buffered']
    #allocation9 [shape = 's32[1]{0}', space=sflag, size = 0x4, scoped, tag = 'scoped memory for tpu_custom_call.1']
    #allocation10 [shape = 'u8[4096]{0}', space=vmem, size = 0x1000, scoped, tag = 'output window, operand 0, single buffered']
    %16 = vsyncpa [#allocation3], 0
    %17 = vsyncpa [#allocation6], 0
    %18 = vsyncpa [#allocation9], 0
    %19 = vsyncpa [#allocation4], 0
    // Predicated region
    $region2: #{tpu_custom_call.1} parent=1 // pred_check
      _
    $region3: #{tpu_custom_call.1} parent=1 // pred_check_branch
      %21 = sbr.rel (0) target = $region5
    $region4: #{tpu_custom_call.1} parent=1 // pred_region
      %s23 = ssub.s32 128, 128
      %24 = vsyncadd [#allocation3], %s23
      %s25 = sshll.u32 [#allocation2], 4
      %s26 = int_to_ptr.vmem [resolvable:$true] %s25
      %31 = dma.hbm_to_vmem [thread:$0]  %s0, 128, %s26, [#allocation3], 64, 64, 4
    $region5: #{tpu_custom_call.1} parent=1 // pred_fallthru
      _
    // Predicated region
    $region6: #{tpu_custom_call.1} parent=1 // pred_check
      _
    $region7: #{tpu_custom_call.1} parent=1 // pred_check_branch
      %33 = sbr.rel (0) target = $region9
    $region8: #{tpu_custom_call.1} parent=1 // pred_region
      %s35 = ssub.s32 1024, 1024
      %36 = vsyncadd [#allocation6], %s35
      %s37 = sshll.u32 [#allocation5], 4
      %s38 = int_to_ptr.vmem [resolvable:$true] %s37
      %43 = dma.hbm_to_vmem [thread:$0]  %s1, 1024, %s38, [#allocation6], 64, 64, 4
    $region9: #{tpu_custom_call.1} parent=1 // pred_fallthru
      _
    // Predicated region
    $region10: #{tpu_custom_call.1} parent=1 // pred_check
      _
    $region11: #{tpu_custom_call.1} parent=1 // pred_check_branch
      %45 = sbr.rel (0) target = $region13
    $region12: #{tpu_custom_call.1} parent=1 // pred_region
      _
    $region13: #{tpu_custom_call.1} parent=1 // pred_fallthru
      _
    // Predicated region
    $region14: #{tpu_custom_call.1} parent=1 // pred_check
      _
    $region15: #{tpu_custom_call.1} parent=1 // pred_check_branch
      %47 = sbr.rel (0) target = $region17
    $region16: #{tpu_custom_call.1} parent=1 // pred_region
      _
    $region17: #{tpu_custom_call.1} parent=1 // pred_fallthru
      _
    // Predicated region
    $region18: #{tpu_custom_call.1} parent=1 // pred_check
      _
    $region19: #{tpu_custom_call.1} parent=1 // pred_check_branch
      %49 = sbr.rel (0) target = $region21
    $region20: #{tpu_custom_call.1} parent=1 // pred_region
      _
    $region21: #{tpu_custom_call.1} parent=1 // pred_fallthru
      _
    // Predicated region
    $region22: #{tpu_custom_call.1} parent=1 // pred_check
      _
    $region23: #{tpu_custom_call.1} parent=1 // pred_check_branch
      %51 = sbr.rel (0) target = $region25
    $region24: #{tpu_custom_call.1} parent=1 // pred_region
      %s53 = ssub.s32 1024, 1024
      %54 = vsyncadd [#allocation6], %s53
      %s55 = sshll.u32 [#allocation7], 4
      %s56 = int_to_ptr.vmem [resolvable:$true] %s55
      %61 = dma.hbm_to_vmem [thread:$0]  %s5, 1024, %s56, [#allocation6], 64, 64, 4
    $region25: #{tpu_custom_call.1} parent=1 // pred_fallthru
      _
    // Predicated region
    $region26: #{tpu_custom_call.1} parent=1 // pred_check
      _
    $region27: #{tpu_custom_call.1} parent=1 // pred_check_branch
      %63 = sbr.rel (0) target = $region29
    $region28: #{tpu_custom_call.1} parent=1 // pred_region
      _
    $region29: #{tpu_custom_call.1} parent=1 // pred_fallthru
      _
    // Predicated region
    $region30: #{tpu_custom_call.1} parent=1 // pred_check
      _
    $region31: #{tpu_custom_call.1} parent=1 // pred_check_branch
      %65 = sbr.rel (0) target = $region33
    $region32: #{tpu_custom_call.1} parent=1 // pred_region
      _
    $region33: #{tpu_custom_call.1} parent=1 // pred_fallthru
      _
    // Predicated region
    $region34: #{tpu_custom_call.1} parent=1 // pred_check
      _
    $region35: #{tpu_custom_call.1} parent=1 // pred_check_branch
      %67 = sbr.rel (0) target = $region37
    $region36: #{tpu_custom_call.1} parent=1 // pred_region
      _
    $region37: #{tpu_custom_call.1} parent=1 // pred_fallthru
      _
    // Predicated region
    $region38: #{tpu_custom_call.1} parent=1 // pred_check
      _
    $region39: #{tpu_custom_call.1} parent=1 // pred_check_branch
      %69 = sbr.rel (0) target = $region41
    $region40: #{tpu_custom_call.1} parent=1 // pred_region
      %s71 = ssub.s32 1024, 1024
      %72 = vsyncadd [#allocation9], %s71
      %s73 = sshll.u32 [#allocation8], 4
      %s74 = int_to_ptr.vmem [resolvable:$true] %s73
      %79 = dma.hbm_to_vmem [thread:$0]  %s9, 1024, %s74, [#allocation9], 64, 64, 4
    $region41: #{tpu_custom_call.1} parent=1 // pred_fallthru
      _
    // Predicated region
    $region42: #{tpu_custom_call.1} parent=1 // pred_check
      _
    $region43: #{tpu_custom_call.1} parent=1 // pred_check_branch
      %81 = sbr.rel (0) target = $region45
    $region44: #{tpu_custom_call.1} parent=1 // pred_region
      _
    $region45: #{tpu_custom_call.1} parent=1 // pred_fallthru
      _
    // Predicated region
    $region46: #{tpu_custom_call.1} parent=1 // pred_check
      _
    $region47: #{tpu_custom_call.1} parent=1 // pred_check_branch
      %83 = sbr.rel (0) target = $region49
    $region48: #{tpu_custom_call.1} parent=1 // pred_region
      %84 = dma.done [#allocation3], 128
    $region49: #{tpu_custom_call.1} parent=1 // pred_fallthru
      _
    // Predicated region
    $region50: #{tpu_custom_call.1} parent=1 // pred_check
      _
    $region51: #{tpu_custom_call.1} parent=1 // pred_check_branch
      %86 = sbr.rel (0) target = $region53
    $region52: #{tpu_custom_call.1} parent=1 // pred_region
      %87 = dma.done [#allocation6], 1024
    $region53: #{tpu_custom_call.1} parent=1 // pred_fallthru
      _
    // Predicated region
    $region54: #{tpu_custom_call.1} parent=1 // pred_check
      _
    $region55: #{tpu_custom_call.1} parent=1 // pred_check_branch
      %89 = sbr.rel (0) target = $region57
    $region56: #{tpu_custom_call.1} parent=1 // pred_region
      %90 = dma.done [#allocation6], 1024
    $region57: #{tpu_custom_call.1} parent=1 // pred_fallthru
      _
    // Predicated region
    $region58: #{tpu_custom_call.1} parent=1 // pred_check
      _
    $region59: #{tpu_custom_call.1} parent=1 // pred_check_branch
      %92 = sbr.rel (0) target = $region61
    $region60: #{tpu_custom_call.1} parent=1 // pred_region
      %93 = dma.done [#allocation9], 1024
    $region61: #{tpu_custom_call.1} parent=1 // pred_fallthru
      _
    %v95 = vld [vmem:[#allocation2] sm:$0xf]
    %v96 = vld [vmem:[#allocation2 + $0x4] sm:$0xf]
    %v97 = vld [vmem:[#allocation5] sm:$0xf]
    %v98 = vld [vmem:[#allocation5 + $0x4] sm:$0xf]
    %v99 = vld [vmem:[#allocation5 + $0x8] sm:$0xf]
    %v100 = vld [vmem:[#allocation5 + $0xc] sm:$0xf]
    %v101 = vld [vmem:[#allocation5 + $0x10] sm:$0xf]
    %v102 = vld [vmem:[#allocation5 + $0x14] sm:$0xf]
    %v103 = vld [vmem:[#allocation5 + $0x18] sm:$0xf]
    %v104 = vld [vmem:[#allocation5 + $0x1c] sm:$0xf]
    %v105 = vld [vmem:[#allocation5 + $0x20] sm:$0xf]
    %v106 = vld [vmem:[#allocation5 + $0x24] sm:$0xf]
    %v107 = vld [vmem:[#allocation5 + $0x28] sm:$0xf]
    %v108 = vld [vmem:[#allocation5 + $0x2c] sm:$0xf]
    %v109 = vld [vmem:[#allocation5 + $0x30] sm:$0xf]
    %v110 = vld [vmem:[#allocation5 + $0x34] sm:$0xf]
    %v111 = vld [vmem:[#allocation5 + $0x38] sm:$0xf]
    %v112 = vld [vmem:[#allocation5 + $0x3c] sm:$0xf]
    %v113 = vld [vmem:[%s2] sm:$0x1]
    %v115 = vlaneseq
    %v116 = vshrl.u32 %v115, 7
    %v117 = vsub.s32 0, %v116
    %v118 = vrot.slane %v113, %v117
    %v122 = vunpack.c.l.b16 %v95
    %v123 = vunpack.c.l.b16 %v96
    %v124 = vpack.c.b16 %v123, %v122
    %v142 = vunpack.c.l.b16 %v97
    %v143 = vunpack.c.l.b16 %v98
    %v144 = vunpack.c.l.b16 %v99
    %v145 = vunpack.c.l.b16 %v100
    %v146 = vunpack.c.l.b16 %v101
    %v147 = vunpack.c.l.b16 %v102
    %v148 = vunpack.c.l.b16 %v103
    %v149 = vunpack.c.l.b16 %v104
    %v150 = vunpack.c.l.b16 %v105
    %v151 = vunpack.c.l.b16 %v106
    %v152 = vunpack.c.l.b16 %v107
    %v153 = vunpack.c.l.b16 %v108
    %v154 = vunpack.c.l.b16 %v109
    %v155 = vunpack.c.l.b16 %v110
    %v156 = vunpack.c.l.b16 %v111
    %v157 = vunpack.c.l.b16 %v112
    %v158 = vpack.c.b16 %v143, %v142
    %v159 = vpack.c.b16 %v145, %v144
    %v160 = vpack.c.b16 %v147, %v146
    %v161 = vpack.c.b16 %v149, %v148
    %v162 = vpack.c.b16 %v151, %v150
    %v163 = vpack.c.b16 %v153, %v152
    %v164 = vpack.c.b16 %v155, %v154
    %v165 = vpack.c.b16 %v157, %v156
    %174 = vmatprep.subr.bf16.mxu0 0
    %175 = vmatpush1.bf16.msra.mxu0 %v158
    %176 = vmatprep.subr.bf16.mxu0 0
    %177 = vmatpush1.bf16.msra.mxu0 %v159
    %178 = vmatprep.subr.bf16.mxu0 0
    %179 = vmatpush1.bf16.msra.mxu0 %v160
    %180 = vmatprep.subr.bf16.mxu0 0
    %181 = vmatpush1.bf16.msra.mxu0 %v161
    %182 = vmatprep.subr.bf16.mxu0 0
    %183 = vmatpush1.bf16.msra.mxu0 %v162
    %184 = vmatprep.subr.bf16.mxu0 0
    %185 = vmatpush1.bf16.msra.mxu0 %v163
    %186 = vmatprep.subr.bf16.mxu0 0
    %187 = vmatpush1.bf16.msra.mxu0 %v164
    %188 = vmatprep.subr.bf16.mxu0 0
    %189 = vmatpush1.bf16.msra.mxu0 %v165
    %190 = vmatprep.subr.bf16.mxu0 0
    %191 = vmatpush1.bf16.msra.mxu0 0
    %192 = vmatprep.subr.bf16.mxu0 0
    %193 = vmatpush1.bf16.msra.mxu0 0
    %194 = vmatprep.subr.bf16.mxu0 0
    %195 = vmatpush1.bf16.msra.mxu0 0
    %196 = vmatprep.subr.bf16.mxu0 0
    %197 = vmatpush1.bf16.msra.mxu0 0
    %198 = vmatprep.subr.bf16.mxu0 0
    %199 = vmatpush1.bf16.msra.mxu0 0
    %200 = vmatprep.subr.bf16.mxu0 0
    %201 = vmatpush1.bf16.msra.mxu0 0
    %202 = vmatprep.subr.bf16.mxu0 0
    %203 = vmatpush1.bf16.msra.mxu0 0
    %204 = vmatprep.subr.bf16.mxu0 0
    %205 = vmatpush1.bf16.msra.mxu0 0
    %206 = vmatprep.mubr.bf16.mxu0 0
    %207 = vmatmul.mubr.bf16.gmra.mrb[0].mxu0 %v124
    %v208 = vpop.f32.mrb[0].mxu0
    %v209 = vadd.f32 %v118, %v208
    %v210 = vpop.f32.mrb[0].mxu0
    %v211 = vpop.f32.mrb[0].mxu0
    %v212 = vadd.f32 %v118, %v211
    %v213 = vpop.f32.mrb[0].mxu0
    %214 = vdwg.mxu0
    %215 = vadd.xlane.f32.xlu0 %v209
    %v216 = vpop.xlane.xlu0 %215
    %217 = vadd.xlane.f32.xlu0 %v212
    %v218 = vpop.xlane.xlu0 %217
    %v219 = vmul.f32 %v209, %v209
    %v220 = vmul.f32 %v212, %v212
    %221 = vadd.xlane.f32.xlu0 %v219
    %v222 = vpop.xlane.xlu0 %221
    %223 = vadd.xlane.f32.xlu0 %v220
    %v224 = vpop.xlane.xlu0 %223
    %v225 = vrcp.pop 32.0
    %v226 = vmul.f32 %v216, %v225
    %v227 = vmul.f32 %v218, %v225
    %v228 = vmul.f32 %v222, %v225
    %v229 = vmul.f32 %v224, %v225
    %v230 = vmul.f32 %v226, %v226
    %v231 = vmul.f32 %v227, %v227
    %v232 = vsub.f32 %v228, %v230
    %v233 = vsub.f32 %v229, %v231
    %v234 = vmax.f32 %v232, 0.0
    %v235 = vmax.f32 %v233, 0.0
    %v236 = vadd.f32 %v234, 1e-05
    %v237 = vadd.f32 %v235, 1e-05
    %v238 = vrsqrt.pop %v236
    %v239 = vrsqrt.pop %v237
    %v240 = vsub.f32 %v209, %v226
    %v241 = vsub.f32 %v212, %v227
    %v242 = vmul.f32 %v240, %v238
    %v243 = vmul.f32 %v241, %v239
    %v244 = vld [vmem:[%s3] sm:$0x1]
    %v246 = vlaneseq
    %v247 = vshrl.u32 %v246, 7
    %v248 = vsub.s32 0, %v247
    %v249 = vrot.slane %v244, %v248
    %v251 = vmul.f32 %v242, %v249
    %v252 = vmul.f32 %v243, %v249
    %v253 = vld [vmem:[%s4] sm:$0x1]
    %v255 = vlaneseq
    %v256 = vshrl.u32 %v255, 7
    %v257 = vsub.s32 0, %v256
    %v258 = vrot.slane %v253, %v257
    %v260 = vadd.f32 %v251, %v258
    %v261 = vadd.f32 %v252, %v258
    %v262 = vxor.u32 %v260, 2147483648
    %v263 = vxor.u32 %v261, 2147483648
    %v264 = vmul.f32 %v262, 1.442695
    %v265 = vpow.pop %v264
    %v266 = vmul.f32 %v263, 1.442695
    %v267 = vpow.pop %v266
    %v268 = vadd.f32 %v265, 1.0
    %v269 = vadd.f32 %v267, 1.0
    %v270 = vrcp.pop %v268
    %v271 = vmul.f32 1.0, %v270
    %v272 = vrcp.pop %v269
    %v273 = vmul.f32 1.0, %v272
    %v274 = vmul.f32 %v260, %v271
    %v275 = vmul.f32 %v261, %v273
    %v276 = vpack.c.bf16 %v275, %v274
    %v277 = vld [vmem:[#allocation7] sm:$0xf]
    %v278 = vld [vmem:[#allocation7 + $0x4] sm:$0xf]
    %v279 = vld [vmem:[#allocation7 + $0x8] sm:$0xf]
    %v280 = vld [vmem:[#allocation7 + $0xc] sm:$0xf]
    %v281 = vld [vmem:[#allocation7 + $0x10] sm:$0xf]
    %v282 = vld [vmem:[#allocation7 + $0x14] sm:$0xf]
    %v283 = vld [vmem:[#allocation7 + $0x18] sm:$0xf]
    %v284 = vld [vmem:[#allocation7 + $0x1c] sm:$0xf]
    %v285 = vld [vmem:[#allocation7 + $0x20] sm:$0xf]
    %v286 = vld [vmem:[#allocation7 + $0x24] sm:$0xf]
    %v287 = vld [vmem:[#allocation7 + $0x28] sm:$0xf]
    %v288 = vld [vmem:[#allocation7 + $0x2c] sm:$0xf]
    %v289 = vld [vmem:[#allocation7 + $0x30] sm:$0xf]
    %v290 = vld [vmem:[#allocation7 + $0x34] sm:$0xf]
    %v291 = vld [vmem:[#allocation7 + $0x38] sm:$0xf]
    %v292 = vld [vmem:[#allocation7 + $0x3c] sm:$0xf]
    %v293 = vld [vmem:[%s6] sm:$0x1]
    %v295 = vlaneseq
    %v296 = vshrl.u32 %v295, 7
    %v297 = vsub.s32 0, %v296
    %v298 = vrot.slane %v293, %v297
    %v316 = vunpack.c.l.b16 %v277
    %v317 = vunpack.c.l.b16 %v278
    %v318 = vunpack.c.l.b16 %v279
    %v319 = vunpack.c.l.b16 %v280
    %v320 = vunpack.c.l.b16 %v281
    %v321 = vunpack.c.l.b16 %v282
    %v322 = vunpack.c.l.b16 %v283
    %v323 = vunpack.c.l.b16 %v284
    %v324 = vunpack.c.l.b16 %v285
    %v325 = vunpack.c.l.b16 %v286
    %v326 = vunpack.c.l.b16 %v287
    %v327 = vunpack.c.l.b16 %v288
    %v328 = vunpack.c.l.b16 %v289
    %v329 = vunpack.c.l.b16 %v290
    %v330 = vunpack.c.l.b16 %v291
    %v331 = vunpack.c.l.b16 %v292
    %v332 = vpack.c.b16 %v317, %v316
    %v333 = vpack.c.b16 %v319, %v318
    %v334 = vpack.c.b16 %v321, %v320
    %v335 = vpack.c.b16 %v323, %v322
    %v336 = vpack.c.b16 %v325, %v324
    %v337 = vpack.c.b16 %v327, %v326
    %v338 = vpack.c.b16 %v329, %v328
    %v339 = vpack.c.b16 %v331, %v330
    %348 = vmatprep.subr.bf16.mxu0 0
    %349 = vmatpush1.bf16.msra.mxu0 %v332
    %350 = vmatprep.subr.bf16.mxu0 0
    %351 = vmatpush1.bf16.msra.mxu0 %v333
    %352 = vmatprep.subr.bf16.mxu0 0
    %353 = vmatpush1.bf16.msra.mxu0 %v334
    %354 = vmatprep.subr.bf16.mxu0 0
    %355 = vmatpush1.bf16.msra.mxu0 %v335
    %356 = vmatprep.subr.bf16.mxu0 0
    %357 = vmatpush1.bf16.msra.mxu0 %v336
    %358 = vmatprep.subr.bf16.mxu0 0
    %359 = vmatpush1.bf16.msra.mxu0 %v337
    %360 = vmatprep.subr.bf16.mxu0 0
    %361 = vmatpush1.bf16.msra.mxu0 %v338
    %362 = vmatprep.subr.bf16.mxu0 0
    %363 = vmatpush1.bf16.msra.mxu0 %v339
    %364 = vmatprep.subr.bf16.mxu0 0
    %365 = vmatpush1.bf16.msra.mxu0 0
    %366 = vmatprep.subr.bf16.mxu0 0
    %367 = vmatpush1.bf16.msra.mxu0 0
    %368 = vmatprep.subr.bf16.mxu0 0
    %369 = vmatpush1.bf16.msra.mxu0 0
    %370 = vmatprep.subr.bf16.mxu0 0
    %371 = vmatpush1.bf16.msra.mxu0 0
    %372 = vmatprep.subr.bf16.mxu0 0
    %373 = vmatpush1.bf16.msra.mxu0 0
    %374 = vmatprep.subr.bf16.mxu0 0
    %375 = vmatpush1.bf16.msra.mxu0 0
    %376 = vmatprep.subr.bf16.mxu0 0
    %377 = vmatpush1.bf16.msra.mxu0 0
    %378 = vmatprep.subr.bf16.mxu0 0
    %379 = vmatpush1.bf16.msra.mxu0 0
    %380 = vmatprep.mubr.bf16.mxu0 0
    %381 = vmatmul.mubr.bf16.gmra.mrb[0].mxu0 %v276
    %v382 = vpop.f32.mrb[0].mxu0
    %v383 = vadd.f32 %v298, %v382
    %v384 = vpop.f32.mrb[0].mxu0
    %v385 = vpop.f32.mrb[0].mxu0
    %v386 = vadd.f32 %v298, %v385
    %v387 = vpop.f32.mrb[0].mxu0
    %388 = vdwg.mxu0
    %389 = vadd.xlane.f32.xlu0 %v383
    %v390 = vpop.xlane.xlu0 %389
    %391 = vadd.xlane.f32.xlu0 %v386
    %v392 = vpop.xlane.xlu0 %391
    %v393 = vmul.f32 %v383, %v383
    %v394 = vmul.f32 %v386, %v386
    %395 = vadd.xlane.f32.xlu0 %v393
    %v396 = vpop.xlane.xlu0 %395
    %397 = vadd.xlane.f32.xlu0 %v394
    %v398 = vpop.xlane.xlu0 %397
    %v399 = vmul.f32 %v390, %v225
    %v400 = vmul.f32 %v392, %v225
    %v401 = vmul.f32 %v396, %v225
    %v402 = vmul.f32 %v398, %v225
    %v403 = vmul.f32 %v399, %v399
    %v404 = vmul.f32 %v400, %v400
    %v405 = vsub.f32 %v401, %v403
    %v406 = vsub.f32 %v402, %v404
    %v407 = vmax.f32 %v405, 0.0
    %v408 = vmax.f32 %v406, 0.0
    %v409 = vadd.f32 %v407, 1e-05
    %v410 = vadd.f32 %v408, 1e-05
    %v411 = vrsqrt.pop %v409
    %v412 = vrsqrt.pop %v410
    %v413 = vsub.f32 %v383, %v399
    %v414 = vsub.f32 %v386, %v400
    %v415 = vmul.f32 %v413, %v411
    %v416 = vmul.f32 %v414, %v412
    %v417 = vld [vmem:[%s7] sm:$0x1]
    %v419 = vlaneseq
    %v420 = vshrl.u32 %v419, 7
    %v421 = vsub.s32 0, %v420
    %v422 = vrot.slane %v417, %v421
    %v424 = vmul.f32 %v415, %v422
    %v425 = vmul.f32 %v416, %v422
    %v426 = vld [vmem:[%s8] sm:$0x1]
    %v428 = vlaneseq
    %v429 = vshrl.u32 %v428, 7
    %v430 = vsub.s32 0, %v429
    %v431 = vrot.slane %v426, %v430
    %v433 = vadd.f32 %v424, %v431
    %v434 = vadd.f32 %v425, %v431
    %v435 = vxor.u32 %v433, 2147483648
    %v436 = vxor.u32 %v434, 2147483648
    %v437 = vmul.f32 %v435, 1.442695
    %v438 = vpow.pop %v437
    %v439 = vmul.f32 %v436, 1.442695
    %v440 = vpow.pop %v439
    %v441 = vadd.f32 %v438, 1.0
    %v442 = vadd.f32 %v440, 1.0
    %v443 = vrcp.pop %v441
    %v444 = vmul.f32 1.0, %v443
    %v445 = vrcp.pop %v442
    %v446 = vmul.f32 1.0, %v445
    %v447 = vmul.f32 %v433, %v444
    %v448 = vmul.f32 %v434, %v446
    %v449 = vpack.c.bf16 %v448, %v447
    %v450 = vld [vmem:[#allocation8] sm:$0xf]
    %v451 = vld [vmem:[#allocation8 + $0x4] sm:$0xf]
    %v452 = vld [vmem:[#allocation8 + $0x8] sm:$0xf]
    %v453 = vld [vmem:[#allocation8 + $0xc] sm:$0xf]
    %v454 = vld [vmem:[#allocation8 + $0x10] sm:$0xf]
    %v455 = vld [vmem:[#allocation8 + $0x14] sm:$0xf]
    %v456 = vld [vmem:[#allocation8 + $0x18] sm:$0xf]
    %v457 = vld [vmem:[#allocation8 + $0x1c] sm:$0xf]
    %v458 = vld [vmem:[#allocation8 + $0x20] sm:$0xf]
    %v459 = vld [vmem:[#allocation8 + $0x24] sm:$0xf]
    %v460 = vld [vmem:[#allocation8 + $0x28] sm:$0xf]
    %v461 = vld [vmem:[#allocation8 + $0x2c] sm:$0xf]
    %v462 = vld [vmem:[#allocation8 + $0x30] sm:$0xf]
    %v463 = vld [vmem:[#allocation8 + $0x34] sm:$0xf]
    %v464 = vld [vmem:[#allocation8 + $0x38] sm:$0xf]
    %v465 = vld [vmem:[#allocation8 + $0x3c] sm:$0xf]
    %v466 = vld [vmem:[%s10] sm:$0x1]
    %v468 = vlaneseq
    %v469 = vshrl.u32 %v468, 7
    %v470 = vsub.s32 0, %v469
    %v471 = vrot.slane %v466, %v470
    %v489 = vunpack.c.l.b16 %v450
    %v490 = vunpack.c.l.b16 %v451
    %v491 = vunpack.c.l.b16 %v452
    %v492 = vunpack.c.l.b16 %v453
    %v493 = vunpack.c.l.b16 %v454
    %v494 = vunpack.c.l.b16 %v455
    %v495 = vunpack.c.l.b16 %v456
    %v496 = vunpack.c.l.b16 %v457
    %v497 = vunpack.c.l.b16 %v458
    %v498 = vunpack.c.l.b16 %v459
    %v499 = vunpack.c.l.b16 %v460
    %v500 = vunpack.c.l.b16 %v461
    %v501 = vunpack.c.l.b16 %v462
    %v502 = vunpack.c.l.b16 %v463
    %v503 = vunpack.c.l.b16 %v464
    %v504 = vunpack.c.l.b16 %v465
    %v505 = vpack.c.b16 %v490, %v489
    %v506 = vpack.c.b16 %v492, %v491
    %v507 = vpack.c.b16 %v494, %v493
    %v508 = vpack.c.b16 %v496, %v495
    %v509 = vpack.c.b16 %v498, %v497
    %v510 = vpack.c.b16 %v500, %v499
    %v511 = vpack.c.b16 %v502, %v501
    %v512 = vpack.c.b16 %v504, %v503
    %521 = vmatprep.subr.bf16.mxu0 0
    %522 = vmatpush1.bf16.msra.mxu0 %v505
    %523 = vmatprep.subr.bf16.mxu0 0
    %524 = vmatpush1.bf16.msra.mxu0 %v506
    %525 = vmatprep.subr.bf16.mxu0 0
    %526 = vmatpush1.bf16.msra.mxu0 %v507
    %527 = vmatprep.subr.bf16.mxu0 0
    %528 = vmatpush1.bf16.msra.mxu0 %v508
    %529 = vmatprep.subr.bf16.mxu0 0
    %530 = vmatpush1.bf16.msra.mxu0 %v509
    %531 = vmatprep.subr.bf16.mxu0 0
    %532 = vmatpush1.bf16.msra.mxu0 %v510
    %533 = vmatprep.subr.bf16.mxu0 0
    %534 = vmatpush1.bf16.msra.mxu0 %v511
    %535 = vmatprep.subr.bf16.mxu0 0
    %536 = vmatpush1.bf16.msra.mxu0 %v512
    %537 = vmatprep.subr.bf16.mxu0 0
    %538 = vmatpush1.bf16.msra.mxu0 0
    %539 = vmatprep.subr.bf16.mxu0 0
    %540 = vmatpush1.bf16.msra.mxu0 0
    %541 = vmatprep.subr.bf16.mxu0 0
    %542 = vmatpush1.bf16.msra.mxu0 0
    %543 = vmatprep.subr.bf16.mxu0 0
    %544 = vmatpush1.bf16.msra.mxu0 0
    %545 = vmatprep.subr.bf16.mxu0 0
    %546 = vmatpush1.bf16.msra.mxu0 0
    %547 = vmatprep.subr.bf16.mxu0 0
    %548 = vmatpush1.bf16.msra.mxu0 0
    %549 = vmatprep.subr.bf16.mxu0 0
    %550 = vmatpush1.bf16.msra.mxu0 0
    %551 = vmatprep.subr.bf16.mxu0 0
    %552 = vmatpush1.bf16.msra.mxu0 0
    %553 = vmatprep.mubr.bf16.mxu0 0
    %554 = vmatmul.mubr.bf16.gmra.mrb[0].mxu0 %v449
    %v555 = vpop.f32.mrb[0].mxu0
    %v556 = vadd.f32 %v471, %v555
    %v557 = vpop.f32.mrb[0].mxu0
    %v558 = vpop.f32.mrb[0].mxu0
    %v559 = vadd.f32 %v471, %v558
    %v560 = vpop.f32.mrb[0].mxu0
    %561 = vdwg.mxu0
    %v562 = vpack.c.bf16 %v559, %v556
    %v564 = vunpack.c.l.b16 %v562
    %v565 = vunpack.c.h.b16 %v562
    %v566 = vpack.c.b16 %v564, %v564
    %v567 = vpack.c.b16 %v565, %v565
    %570 = vst [vmem:[#allocation10] sm:$0xf] %v566
    %571 = vst [vmem:[#allocation10 + $0x4] sm:$0xf] %v567
    // Predicated region
    $region62: #{tpu_custom_call.1} parent=1 // pred_check
      _
    $region63: #{tpu_custom_call.1} parent=1 // pred_check_branch
      %573 = sbr.rel (0) target = $region65
    $region64: #{tpu_custom_call.1} parent=1 // pred_region
      %s575 = ssub.s32 128, 128
      %576 = vsyncadd [#allocation4], %s575
      %s577 = sshll.u32 [#allocation10], 4
      %s578 = int_to_ptr.vmem [resolvable:$true] %s577
      %583 = dma.vmem_to_hbm [thread:$0]  %s578, 128, %s11, [#allocation4], 64, 64, 4
    $region65: #{tpu_custom_call.1} parent=1 // pred_fallthru
      _
    // Predicated region
    $region66: #{tpu_custom_call.1} parent=1 // pred_check
      _
    $region67: #{tpu_custom_call.1} parent=1 // pred_check_branch
      %585 = sbr.rel (0) target = $region69
    $region68: #{tpu_custom_call.1} parent=1 // pred_region
      %586 = dma.done [#allocation4], 128
    $region69: #{tpu_custom_call.1} parent=1 // pred_fallthru
      _
    %587 = vsyncpa [#allocation3], 1
    %588 = vsyncpa [#allocation6], 1
    %589 = vsyncpa [#allocation9], 1
    %590 = vsyncpa [#allocation4], 1

// kernel: tpu_custom_call.1
$region0: #{tpu_custom_call.1}
  #allocation0 [shape = 'u32[]', space=smem, size = 0x4, offset = 0x4, fixed_abs, tag = 'smem constant byte address 0x4 - core index']
  #allocation1 [shape = 'u32[144,128]{1,0:T(1,128)}', space=vmem, size = 0x12000, scoped, tag = 'internal scratch']
  %s0 = inlined_call_operand.hbm [shape: bf16[16,128], index: 0, kind: input, shape index: {}]
  %s1 = inlined_call_operand.hbm [shape: bf16[128,128], index: 1, kind: input, shape index: {}]
  %s2 = inlined_call_operand.vmem [shape: f32[1,128], index: 2, kind: input, shape index: {}]
  %s3 = inlined_call_operand.vmem [shape: f32[1,128], index: 3, kind: input, shape index: {}]
  %s4 = inlined_call_operand.vmem [shape: f32[1,128], index: 4, kind: input, shape index: {}]
  %s5 = inlined_call_operand.hbm [shape: bf16[128,128], index: 5, kind: input, shape index: {}]
  %s6 = inlined_call_operand.vmem [shape: f32[1,128], index: 6, kind: input, shape index: {}]
  %s7 = inlined_call_operand.vmem [shape: f32[1,128], index: 7, kind: input, shape index: {}]
  %s8 = inlined_call_operand.vmem [shape: f32[1,128], index: 8, kind: input, shape index: {}]
  %s9 = inlined_call_operand.hbm [shape: bf16[128,128], index: 9, kind: input, shape index: {}]
  %s10 = inlined_call_operand.vmem [shape: f32[1,128], index: 10, kind: input, shape index: {}]
  %s11 = inlined_call_operand.hbm [shape: bf16[16,128], index: 11, kind: output, shape index: {}]
  %s12 = sld [smem:[#allocation0]]
  $region70: #{tpu_custom_call.1} parent=0
    _
  %s14 = ssub.s32 1, %s12
  %s15 = scalar_select 0, %s14, %s12
  $region1: #{tpu_custom_call.1} parent=0
    #allocation2 [shape = 'u8[4096]{0}', space=vmem, size = 0x1000, scoped, tag = 'input window, operand 0, single buffered']
    #allocation3 [shape = 's32[1]{0}', space=sflag, size = 0x4, scoped, tag = 'scoped memory for tpu_custom_call.1']
    #allocation4 [shape = 's32[1]{0}', space=sflag, size = 0x4, scoped, tag = 'scoped memory for tpu_custom_call.1']
    #allocation5 [shape = 'u8[32768]{0}', space=vmem, size = 0x8000, scoped, tag = 'input window, operand 1, single buffered']
    #allocation6 [shape = 's32[1]{0}', space=sflag, size = 0x4, scoped, tag = 'scoped memory for tpu_custom_call.1']
    #allocation7 [shape = 'u8[32768]{0}', space=vmem, size = 0x8000, scoped, tag = 'input window, operand 5, single buffered']
    #allocation8 [shape = 'u8[32768]{0}', space=vmem, size = 0x8000, scoped, tag = 'input window, operand 9, single buffered']
    #allocation9 [shape = 's32[1]{0}', space=sflag, size = 0x4, scoped, tag = 'scoped memory for tpu_custom_call.1']
    #allocation10 [shape = 'u8[4096]{0}', space=vmem, size = 0x1000, scoped, tag = 'output window, operand 0, single buffered']
    %16 = vsyncpa [#allocation3], 0
    %17 = vsyncpa [#allocation6], 0
    %18 = vsyncpa [#allocation9], 0
    %19 = vsyncpa [#allocation4], 0
    // Predicated region
    $region2: #{tpu_custom_call.1} parent=1 // pred_check
      _
    $region3: #{tpu_custom_call.1} parent=1 // pred_check_branch
      %21 = sbr.rel (0) target = $region5
    $region4: #{tpu_custom_call.1} parent=1 // pred_region
      %s23 = ssub.s32 128, 128
      %24 = vsyncadd [#allocation3], %s23
      %s25 = sshll.u32 [#allocation2], 4
      %s26 = int_to_ptr.vmem [resolvable:$true] %s25
      %31 = dma.hbm_to_vmem [thread:$0]  %s0, 128, %s26, [#allocation3], 64, 64, 4
    $region5: #{tpu_custom_call.1} parent=1 // pred_fallthru
      _
    // Predicated region
    $region6: #{tpu_custom_call.1} parent=1 // pred_check
      _
    $region7: #{tpu_custom_call.1} parent=1 // pred_check_branch
      %33 = sbr.rel (0) target = $region9
    $region8: #{tpu_custom_call.1} parent=1 // pred_region
      %s35 = ssub.s32 1024, 1024
      %36 = vsyncadd [#allocation6], %s35
      %s37 = sshll.u32 [#allocation5], 4
      %s38 = int_to_ptr.vmem [resolvable:$true] %s37
      %43 = dma.hbm_to_vmem [thread:$0]  %s1, 1024, %s38, [#allocation6], 64, 64, 4
    $region9: #{tpu_custom_call.1} parent=1 // pred_fallthru
      _
    // Predicated region
    $region10: #{tpu_custom_call.1} parent=1 // pred_check
      _
    $region11: #{tpu_custom_call.1} parent=1 // pred_check_branch
      %45 = sbr.rel (0) target = $region13
    $region12: #{tpu_custom_call.1} parent=1 // pred_region
      _
    $region13: #{tpu_custom_call.1} parent=1 // pred_fallthru
      _
    // Predicated region
    $region14: #{tpu_custom_call.1} parent=1 // pred_check
      _
    $region15: #{tpu_custom_call.1} parent=1 // pred_check_branch
      %47 = sbr.rel (0) target = $region17
    $region16: #{tpu_custom_call.1} parent=1 // pred_region
      _
    $region17: #{tpu_custom_call.1} parent=1 // pred_fallthru
      _
    // Predicated region
    $region18: #{tpu_custom_call.1} parent=1 // pred_check
      _
    $region19: #{tpu_custom_call.1} parent=1 // pred_check_branch
      %49 = sbr.rel (0) target = $region21
    $region20: #{tpu_custom_call.1} parent=1 // pred_region
      _
    $region21: #{tpu_custom_call.1} parent=1 // pred_fallthru
      _
    // Predicated region
    $region22: #{tpu_custom_call.1} parent=1 // pred_check
      _
    $region23: #{tpu_custom_call.1} parent=1 // pred_check_branch
      %51 = sbr.rel (0) target = $region25
    $region24: #{tpu_custom_call.1} parent=1 // pred_region
      %s53 = ssub.s32 1024, 1024
      %54 = vsyncadd [#allocation6], %s53
      %s55 = sshll.u32 [#allocation7], 4
      %s56 = int_to_ptr.vmem [resolvable:$true] %s55
      %61 = dma.hbm_to_vmem [thread:$0]  %s5, 1024, %s56, [#allocation6], 64, 64, 4
    $region25: #{tpu_custom_call.1} parent=1 // pred_fallthru
      _
    // Predicated region
    $region26: #{tpu_custom_call.1} parent=1 // pred_check
      _
    $region27: #{tpu_custom_call.1} parent=1 // pred_check_branch
      %63 = sbr.rel (0) target = $region29
    $region28: #{tpu_custom_call.1} parent=1 // pred_region
      _
    $region29: #{tpu_custom_call.1} parent=1 // pred_fallthru
      _
    // Predicated region
    $region30: #{tpu_custom_call.1} parent=1 // pred_check
      _
    $region31: #{tpu_custom_call.1} parent=1 // pred_check_branch
      %65 = sbr.rel (0) target = $region33
    $region32: #{tpu_custom_call.1} parent=1 // pred_region
      _
    $region33: #{tpu_custom_call.1} parent=1 // pred_fallthru
      _
    // Predicated region
    $region34: #{tpu_custom_call.1} parent=1 // pred_check
      _
    $region35: #{tpu_custom_call.1} parent=1 // pred_check_branch
      %67 = sbr.rel (0) target = $region37
    $region36: #{tpu_custom_call.1} parent=1 // pred_region
      _
    $region37: #{tpu_custom_call.1} parent=1 // pred_fallthru
      _
    // Predicated region
    $region38: #{tpu_custom_call.1} parent=1 // pred_check
      _
    $region39: #{tpu_custom_call.1} parent=1 // pred_check_branch
      %69 = sbr.rel (0) target = $region41
    $region40: #{tpu_custom_call.1} parent=1 // pred_region
      %s71 = ssub.s32 1024, 1024
      %72 = vsyncadd [#allocation9], %s71
      %s73 = sshll.u32 [#allocation8], 4
      %s74 = int_to_ptr.vmem [resolvable:$true] %s73
      %79 = dma.hbm_to_vmem [thread:$0]  %s9, 1024, %s74, [#allocation9], 64, 64, 4
    $region41: #{tpu_custom_call.1} parent=1 // pred_fallthru
      _
    // Predicated region
    $region42: #{tpu_custom_call.1} parent=1 // pred_check
      _
    $region43: #{tpu_custom_call.1} parent=1 // pred_check_branch
      %81 = sbr.rel (0) target = $region45
    $region44: #{tpu_custom_call.1} parent=1 // pred_region
      _
    $region45: #{tpu_custom_call.1} parent=1 // pred_fallthru
      _
    // Predicated region
    $region46: #{tpu_custom_call.1} parent=1 // pred_check
      _
    $region47: #{tpu_custom_call.1} parent=1 // pred_check_branch
      %83 = sbr.rel (0) target = $region49
    $region48: #{tpu_custom_call.1} parent=1 // pred_region
      %84 = dma.done [#allocation3], 128
    $region49: #{tpu_custom_call.1} parent=1 // pred_fallthru
      _
    // Predicated region
    $region50: #{tpu_custom_call.1} parent=1 // pred_check
      _
    $region51: #{tpu_custom_call.1} parent=1 // pred_check_branch
      %86 = sbr.rel (0) target = $region53
    $region52: #{tpu_custom_call.1} parent=1 // pred_region
      %87 = dma.done [#allocation6], 1024
    $region53: #{tpu_custom_call.1} parent=1 // pred_fallthru
      _
    // Predicated region
    $region54: #{tpu_custom_call.1} parent=1 // pred_check
      _
    $region55: #{tpu_custom_call.1} parent=1 // pred_check_branch
      %89 = sbr.rel (0) target = $region57
    $region56: #{tpu_custom_call.1} parent=1 // pred_region
      %90 = dma.done [#allocation6], 1024
    $region57: #{tpu_custom_call.1} parent=1 // pred_fallthru
      _
    // Predicated region
    $region58: #{tpu_custom_call.1} parent=1 // pred_check
      _
    $region59: #{tpu_custom_call.1} parent=1 // pred_check_branch
      %92 = sbr.rel (0) target = $region61
    $region60: #{tpu_custom_call.1} parent=1 // pred_region
      %93 = dma.done [#allocation9], 1024
    $region61: #{tpu_custom_call.1} parent=1 // pred_fallthru
      _
    %v95 = vld [vmem:[#allocation2] sm:$0xf]
    %v96 = vld [vmem:[#allocation2 + $0x4] sm:$0xf]
    %v97 = vld [vmem:[#allocation5] sm:$0xf]
    %v98 = vld [vmem:[#allocation5 + $0x4] sm:$0xf]
    %v99 = vld [vmem:[#allocation5 + $0x8] sm:$0xf]
    %v100 = vld [vmem:[#allocation5 + $0xc] sm:$0xf]
    %v101 = vld [vmem:[#allocation5 + $0x10] sm:$0xf]
    %v102 = vld [vmem:[#allocation5 + $0x14] sm:$0xf]
    %v103 = vld [vmem:[#allocation5 + $0x18] sm:$0xf]
    %v104 = vld [vmem:[#allocation5 + $0x1c] sm:$0xf]
    %v105 = vld [vmem:[#allocation5 + $0x20] sm:$0xf]
    %v106 = vld [vmem:[#allocation5 + $0x24] sm:$0xf]
    %v107 = vld [vmem:[#allocation5 + $0x28] sm:$0xf]
    %v108 = vld [vmem:[#allocation5 + $0x2c] sm:$0xf]
    %v109 = vld [vmem:[#allocation5 + $0x30] sm:$0xf]
    %v110 = vld [vmem:[#allocation5 + $0x34] sm:$0xf]
    %v111 = vld [vmem:[#allocation5 + $0x38] sm:$0xf]
    %v112 = vld [vmem:[#allocation5 + $0x3c] sm:$0xf]
    %v113 = vld [vmem:[%s2] sm:$0x1]
    %v115 = vlaneseq
    %v116 = vshrl.u32 %v115, 7
    %v117 = vsub.s32 0, %v116
    %v118 = vrot.slane %v113, %v117
    %v122 = vunpack.c.l.b16 %v95
    %v123 = vunpack.c.l.b16 %v96
    %v124 = vpack.c.b16 %v123, %v122
    %v142 = vunpack.c.l.b16 %v97
    %v143 = vunpack.c.l.b16 %v98
    %v144 = vunpack.c.l.b16 %v99
    %v145 = vunpack.c.l.b16 %v100
    %v146 = vunpack.c.l.b16 %v101
    %v147 = vunpack.c.l.b16 %v102
    %v148 = vunpack.c.l.b16 %v103
    %v149 = vunpack.c.l.b16 %v104
    %v150 = vunpack.c.l.b16 %v105
    %v151 = vunpack.c.l.b16 %v106
    %v152 = vunpack.c.l.b16 %v107
    %v153 = vunpack.c.l.b16 %v108
    %v154 = vunpack.c.l.b16 %v109
    %v155 = vunpack.c.l.b16 %v110
    %v156 = vunpack.c.l.b16 %v111
    %v157 = vunpack.c.l.b16 %v112
    %v158 = vpack.c.b16 %v143, %v142
    %v159 = vpack.c.b16 %v145, %v144
    %v160 = vpack.c.b16 %v147, %v146
    %v161 = vpack.c.b16 %v149, %v148
    %v162 = vpack.c.b16 %v151, %v150
    %v163 = vpack.c.b16 %v153, %v152
    %v164 = vpack.c.b16 %v155, %v154
    %v165 = vpack.c.b16 %v157, %v156
    %174 = vmatprep.subr.bf16.mxu0 0
    %175 = vmatpush1.bf16.msra.mxu0 %v158
    %176 = vmatprep.subr.bf16.mxu0 0
    %177 = vmatpush1.bf16.msra.mxu0 %v159
    %178 = vmatprep.subr.bf16.mxu0 0
    %179 = vmatpush1.bf16.msra.mxu0 %v160
    %180 = vmatprep.subr.bf16.mxu0 0
    %181 = vmatpush1.bf16.msra.mxu0 %v161
    %182 = vmatprep.subr.bf16.mxu0 0
    %183 = vmatpush1.bf16.msra.mxu0 %v162
    %184 = vmatprep.subr.bf16.mxu0 0
    %185 = vmatpush1.bf16.msra.mxu0 %v163
    %186 = vmatprep.subr.bf16.mxu0 0
    %187 = vmatpush1.bf16.msra.mxu0 %v164
    %188 = vmatprep.subr.bf16.mxu0 0
    %189 = vmatpush1.bf16.msra.mxu0 %v165
    %190 = vmatprep.subr.bf16.mxu0 0
    %191 = vmatpush1.bf16.msra.mxu0 0
    %192 = vmatprep.subr.bf16.mxu0 0
    %193 = vmatpush1.bf16.msra.mxu0 0
    %194 = vmatprep.subr.bf16.mxu0 0
    %195 = vmatpush1.bf16.msra.mxu0 0
    %196 = vmatprep.subr.bf16.mxu0 0
    %197 = vmatpush1.bf16.msra.mxu0 0
    %198 = vmatprep.subr.bf16.mxu0 0
    %199 = vmatpush1.bf16.msra.mxu0 0
    %200 = vmatprep.subr.bf16.mxu0 0
    %201 = vmatpush1.bf16.msra.mxu0 0
    %202 = vmatprep.subr.bf16.mxu0 0
    %203 = vmatpush1.bf16.msra.mxu0 0
    %204 = vmatprep.subr.bf16.mxu0 0
    %205 = vmatpush1.bf16.msra.mxu0 0
    %206 = vmatprep.mubr.bf16.mxu0 0
    %207 = vmatmul.mubr.bf16.gmra.mrb[0].mxu0 %v124
    %v208 = vpop.f32.mrb[0].mxu0
    %v209 = vadd.f32 %v118, %v208
    %v210 = vpop.f32.mrb[0].mxu0
    %v211 = vpop.f32.mrb[0].mxu0
    %v212 = vadd.f32 %v118, %v211
    %v213 = vpop.f32.mrb[0].mxu0
    %214 = vdwg.mxu0
    %215 = vadd.xlane.f32.xlu0 %v209
    %v216 = vpop.xlane.xlu0 %215
    %217 = vadd.xlane.f32.xlu0 %v212
    %v218 = vpop.xlane.xlu0 %217
    %v219 = vmul.f32 %v209, %v209
    %v220 = vmul.f32 %v212, %v212
    %221 = vadd.xlane.f32.xlu0 %v219
    %v222 = vpop.xlane.xlu0 %221
    %223 = vadd.xlane.f32.xlu0 %v220
    %v224 = vpop.xlane.xlu0 %223
    %v225 = vrcp.pop 32.0
    %v226 = vmul.f32 %v216, %v225
    %v227 = vmul.f32 %v218, %v225
    %v228 = vmul.f32 %v222, %v225
    %v229 = vmul.f32 %v224, %v225
    %v230 = vmul.f32 %v226, %v226
    %v231 = vmul.f32 %v227, %v227
    %v232 = vsub.f32 %v228, %v230
    %v233 = vsub.f32 %v229, %v231
    %v234 = vmax.f32 %v232, 0.0
    %v235 = vmax.f32 %v233, 0.0
    %v236 = vadd.f32 %v234, 1e-05
    %v237 = vadd.f32 %v235, 1e-05
    %v238 = vrsqrt.pop %v236
    %v239 = vrsqrt.pop %v237
    %v240 = vsub.f32 %v209, %v226
    %v241 = vsub.f32 %v212, %v227
    %v242 = vmul.f32 %v240, %v238
    %v243 = vmul.f32 %v241, %v239
    %v244 = vld [vmem:[%s3] sm:$0x1]
    %v246 = vlaneseq
    %v247 = vshrl.u32 %v246, 7
    %v248 = vsub.s32 0, %v247
    %v249 = vrot.slane %v244, %v248
    %v251 = vmul.f32 %v242, %v249
    %v252 = vmul.f32 %v243, %v249
    %v253 = vld [vmem:[%s4] sm:$0x1]
    %v255 = vlaneseq
    %v256 = vshrl.u32 %v255, 7
    %v257 = vsub.s32 0, %v256
    %v258 = vrot.slane %v253, %v257
    %v260 = vadd.f32 %v251, %v258
    %v261 = vadd.f32 %v252, %v258
    %v262 = vxor.u32 %v260, 2147483648
    %v263 = vxor.u32 %v261, 2147483648
    %v264 = vmul.f32 %v262, 1.442695
    %v265 = vpow.pop %v264
    %v266 = vmul.f32 %v263, 1.442695
    %v267 = vpow.pop %v266
    %v268 = vadd.f32 %v265, 1.0
    %v269 = vadd.f32 %v267, 1.0
    %v270 = vrcp.pop %v268
    %v271 = vmul.f32 1.0, %v270
    %v272 = vrcp.pop %v269
    %v273 = vmul.f32 1.0, %v272
    %v274 = vmul.f32 %v260, %v271
    %v275 = vmul.f32 %v261, %v273
    %v276 = vpack.c.bf16 %v275, %v274
    %v277 = vld [vmem:[#allocation7] sm:$0xf]
    %v278 = vld [vmem:[#allocation7 + $0x4] sm:$0xf]
    %v279 = vld [vmem:[#allocation7 + $0x8] sm:$0xf]
    %v280 = vld [vmem:[#allocation7 + $0xc] sm:$0xf]
    %v281 = vld [vmem:[#allocation7 + $0x10] sm:$0xf]
    %v282 = vld [vmem:[#allocation7 + $0x14] sm:$0xf]
    %v283 = vld [vmem:[#allocation7 + $0x18] sm:$0xf]
    %v284 = vld [vmem:[#allocation7 + $0x1c] sm:$0xf]
    %v285 = vld [vmem:[#allocation7 + $0x20] sm:$0xf]
    %v286 = vld [vmem:[#allocation7 + $0x24] sm:$0xf]
    %v287 = vld [vmem:[#allocation7 + $0x28] sm:$0xf]
    %v288 = vld [vmem:[#allocation7 + $0x2c] sm:$0xf]
    %v289 = vld [vmem:[#allocation7 + $0x30] sm:$0xf]
    %v290 = vld [vmem:[#allocation7 + $0x34] sm:$0xf]
    %v291 = vld [vmem:[#allocation7 + $0x38] sm:$0xf]
    %v292 = vld [vmem:[#allocation7 + $0x3c] sm:$0xf]
    %v293 = vld [vmem:[%s6] sm:$0x1]
    %v295 = vlaneseq
    %v296 = vshrl.u32 %v295, 7
    %v297 = vsub.s32 0, %v296
    %v298 = vrot.slane %v293, %v297
    %v316 = vunpack.c.l.b16 %v277
    %v317 = vunpack.c.l.b16 %v278
    %v318 = vunpack.c.l.b16 %v279
    %v319 = vunpack.c.l.b16 %v280
    %v320 = vunpack.c.l.b16 %v281
    %v321 = vunpack.c.l.b16 %v282
    %v322 = vunpack.c.l.b16 %v283
    %v323 = vunpack.c.l.b16 %v284
    %v324 = vunpack.c.l.b16 %v285
    %v325 = vunpack.c.l.b16 %v286
    %v326 = vunpack.c.l.b16 %v287
    %v327 = vunpack.c.l.b16 %v288
    %v328 = vunpack.c.l.b16 %v289
    %v329 = vunpack.c.l.b16 %v290
    %v330 = vunpack.c.l.b16 %v291
    %v331 = vunpack.c.l.b16 %v292
    %v332 = vpack.c.b16 %v317, %v316
    %v333 = vpack.c.b16 %v319, %v318
    %v334 = vpack.c.b16 %v321, %v320
    %v335 = vpack.c.b16 %v323, %v322
    %v336 = vpack.c.b16 %v325, %v324
    %v337 = vpack.c.b16 %v327, %v326
    %v338 = vpack.c.b16 %v329, %v328
    %v339 = vpack.c.b16 %v331, %v330
    %348 = vmatprep.subr.bf16.mxu0 0
    %349 = vmatpush1.bf16.msra.mxu0 %v332
    %350 = vmatprep.subr.bf16.mxu0 0
    %351 = vmatpush1.bf16.msra.mxu0 %v333
    %352 = vmatprep.subr.bf16.mxu0 0
    %353 = vmatpush1.bf16.msra.mxu0 %v334
    %354 = vmatprep.subr.bf16.mxu0 0
    %355 = vmatpush1.bf16.msra.mxu0 %v335
    %356 = vmatprep.subr.bf16.mxu0 0
    %357 = vmatpush1.bf16.msra.mxu0 %v336
    %358 = vmatprep.subr.bf16.mxu0 0
    %359 = vmatpush1.bf16.msra.mxu0 %v337
    %360 = vmatprep.subr.bf16.mxu0 0
    %361 = vmatpush1.bf16.msra.mxu0 %v338
    %362 = vmatprep.subr.bf16.mxu0 0
    %363 = vmatpush1.bf16.msra.mxu0 %v339
    %364 = vmatprep.subr.bf16.mxu0 0
    %365 = vmatpush1.bf16.msra.mxu0 0
    %366 = vmatprep.subr.bf16.mxu0 0
    %367 = vmatpush1.bf16.msra.mxu0 0
    %368 = vmatprep.subr.bf16.mxu0 0
    %369 = vmatpush1.bf16.msra.mxu0 0
    %370 = vmatprep.subr.bf16.mxu0 0
    %371 = vmatpush1.bf16.msra.mxu0 0
    %372 = vmatprep.subr.bf16.mxu0 0
    %373 = vmatpush1.bf16.msra.mxu0 0
    %374 = vmatprep.subr.bf16.mxu0 0
    %375 = vmatpush1.bf16.msra.mxu0 0
    %376 = vmatprep.subr.bf16.mxu0 0
    %377 = vmatpush1.bf16.msra.mxu0 0
    %378 = vmatprep.subr.bf16.mxu0 0
    %379 = vmatpush1.bf16.msra.mxu0 0
    %380 = vmatprep.mubr.bf16.mxu0 0
    %381 = vmatmul.mubr.bf16.gmra.mrb[0].mxu0 %v276
    %v382 = vpop.f32.mrb[0].mxu0
    %v383 = vadd.f32 %v298, %v382
    %v384 = vpop.f32.mrb[0].mxu0
    %v385 = vpop.f32.mrb[0].mxu0
    %v386 = vadd.f32 %v298, %v385
    %v387 = vpop.f32.mrb[0].mxu0
    %388 = vdwg.mxu0
    %389 = vadd.xlane.f32.xlu0 %v383
    %v390 = vpop.xlane.xlu0 %389
    %391 = vadd.xlane.f32.xlu0 %v386
    %v392 = vpop.xlane.xlu0 %391
    %v393 = vmul.f32 %v383, %v383
    %v394 = vmul.f32 %v386, %v386
    %395 = vadd.xlane.f32.xlu0 %v393
    %v396 = vpop.xlane.xlu0 %395
    %397 = vadd.xlane.f32.xlu0 %v394
    %v398 = vpop.xlane.xlu0 %397
    %v399 = vmul.f32 %v390, %v225
    %v400 = vmul.f32 %v392, %v225
    %v401 = vmul.f32 %v396, %v225
    %v402 = vmul.f32 %v398, %v225
    %v403 = vmul.f32 %v399, %v399
    %v404 = vmul.f32 %v400, %v400
    %v405 = vsub.f32 %v401, %v403
    %v406 = vsub.f32 %v402, %v404
    %v407 = vmax.f32 %v405, 0.0
    %v408 = vmax.f32 %v406, 0.0
    %v409 = vadd.f32 %v407, 1e-05
    %v410 = vadd.f32 %v408, 1e-05
    %v411 = vrsqrt.pop %v409
    %v412 = vrsqrt.pop %v410
    %v413 = vsub.f32 %v383, %v399
    %v414 = vsub.f32 %v386, %v400
    %v415 = vmul.f32 %v413, %v411
    %v416 = vmul.f32 %v414, %v412
    %v417 = vld [vmem:[%s7] sm:$0x1]
    %v419 = vlaneseq
    %v420 = vshrl.u32 %v419, 7
    %v421 = vsub.s32 0, %v420
    %v422 = vrot.slane %v417, %v421
    %v424 = vmul.f32 %v415, %v422
    %v425 = vmul.f32 %v416, %v422
    %v426 = vld [vmem:[%s8] sm:$0x1]
    %v428 = vlaneseq
    %v429 = vshrl.u32 %v428, 7
    %v430 = vsub.s32 0, %v429
    %v431 = vrot.slane %v426, %v430
    %v433 = vadd.f32 %v424, %v431
    %v434 = vadd.f32 %v425, %v431
    %v435 = vxor.u32 %v433, 2147483648
    %v436 = vxor.u32 %v434, 2147483648
    %v437 = vmul.f32 %v435, 1.442695
    %v438 = vpow.pop %v437
    %v439 = vmul.f32 %v436, 1.442695
    %v440 = vpow.pop %v439
    %v441 = vadd.f32 %v438, 1.0
    %v442 = vadd.f32 %v440, 1.0
    %v443 = vrcp.pop %v441
    %v444 = vmul.f32 1.0, %v443
    %v445 = vrcp.pop %v442
    %v446 = vmul.f32 1.0, %v445
    %v447 = vmul.f32 %v433, %v444
    %v448 = vmul.f32 %v434, %v446
    %v449 = vpack.c.bf16 %v448, %v447
    %v450 = vld [vmem:[#allocation8] sm:$0xf]
    %v451 = vld [vmem:[#allocation8 + $0x4] sm:$0xf]
    %v452 = vld [vmem:[#allocation8 + $0x8] sm:$0xf]
    %v453 = vld [vmem:[#allocation8 + $0xc] sm:$0xf]
    %v454 = vld [vmem:[#allocation8 + $0x10] sm:$0xf]
    %v455 = vld [vmem:[#allocation8 + $0x14] sm:$0xf]
    %v456 = vld [vmem:[#allocation8 + $0x18] sm:$0xf]
    %v457 = vld [vmem:[#allocation8 + $0x1c] sm:$0xf]
    %v458 = vld [vmem:[#allocation8 + $0x20] sm:$0xf]
    %v459 = vld [vmem:[#allocation8 + $0x24] sm:$0xf]
    %v460 = vld [vmem:[#allocation8 + $0x28] sm:$0xf]
    %v461 = vld [vmem:[#allocation8 + $0x2c] sm:$0xf]
    %v462 = vld [vmem:[#allocation8 + $0x30] sm:$0xf]
    %v463 = vld [vmem:[#allocation8 + $0x34] sm:$0xf]
    %v464 = vld [vmem:[#allocation8 + $0x38] sm:$0xf]
    %v465 = vld [vmem:[#allocation8 + $0x3c] sm:$0xf]
    %v466 = vld [vmem:[%s10] sm:$0x1]
    %v468 = vlaneseq
    %v469 = vshrl.u32 %v468, 7
    %v470 = vsub.s32 0, %v469
    %v471 = vrot.slane %v466, %v470
    %v489 = vunpack.c.l.b16 %v450
    %v490 = vunpack.c.l.b16 %v451
    %v491 = vunpack.c.l.b16 %v452
    %v492 = vunpack.c.l.b16 %v453
    %v493 = vunpack.c.l.b16 %v454
    %v494 = vunpack.c.l.b16 %v455
    %v495 = vunpack.c.l.b16 %v456
    %v496 = vunpack.c.l.b16 %v457
    %v497 = vunpack.c.l.b16 %v458
    %v498 = vunpack.c.l.b16 %v459
    %v499 = vunpack.c.l.b16 %v460
    %v500 = vunpack.c.l.b16 %v461
    %v501 = vunpack.c.l.b16 %v462
    %v502 = vunpack.c.l.b16 %v463
    %v503 = vunpack.c.l.b16 %v464
    %v504 = vunpack.c.l.b16 %v465
    %v505 = vpack.c.b16 %v490, %v489
    %v506 = vpack.c.b16 %v492, %v491
    %v507 = vpack.c.b16 %v494, %v493
    %v508 = vpack.c.b16 %v496, %v495
    %v509 = vpack.c.b16 %v498, %v497
    %v510 = vpack.c.b16 %v500, %v499
    %v511 = vpack.c.b16 %v502, %v501
    %v512 = vpack.c.b16 %v504, %v503
    %521 = vmatprep.subr.bf16.mxu0 0
    %522 = vmatpush1.bf16.msra.mxu0 %v505
    %523 = vmatprep.subr.bf16.mxu0 0
    %524 = vmatpush1.bf16.msra.mxu0 %v506
    %525 = vmatprep.subr.bf16.mxu0 0
    %526 = vmatpush1.bf16.msra.mxu0 %v507
    %527 = vmatprep.subr.bf16.mxu0 0
    %528 = vmatpush1.bf16.msra.mxu0 %v508
    %529 = vmatprep.subr.bf16.mxu0 0
    %530 = vmatpush1.bf16.msra.mxu0 %v509
    %531 = vmatprep.subr.bf16.mxu0 0
    %532 = vmatpush1.bf16.msra.mxu0 %v510
    %533 = vmatprep.subr.bf16.mxu0 0
    %534 = vmatpush1.bf16.msra.mxu0 %v511
    %535 = vmatprep.subr.bf16.mxu0 0
    %536 = vmatpush1.bf16.msra.mxu0 %v512
    %537 = vmatprep.subr.bf16.mxu0 0
    %538 = vmatpush1.bf16.msra.mxu0 0
    %539 = vmatprep.subr.bf16.mxu0 0
    %540 = vmatpush1.bf16.msra.mxu0 0
    %541 = vmatprep.subr.bf16.mxu0 0
    %542 = vmatpush1.bf16.msra.mxu0 0
    %543 = vmatprep.subr.bf16.mxu0 0
    %544 = vmatpush1.bf16.msra.mxu0 0
    %545 = vmatprep.subr.bf16.mxu0 0
    %546 = vmatpush1.bf16.msra.mxu0 0
    %547 = vmatprep.subr.bf16.mxu0 0
    %548 = vmatpush1.bf16.msra.mxu0 0
    %549 = vmatprep.subr.bf16.mxu0 0
    %550 = vmatpush1.bf16.msra.mxu0 0
    %551 = vmatprep.subr.bf16.mxu0 0
    %552 = vmatpush1.bf16.msra.mxu0 0
    %553 = vmatprep.mubr.bf16.mxu0 0
    %554 = vmatmul.mubr.bf16.gmra.mrb[0].mxu0 %v449
    %v555 = vpop.f32.mrb[0].mxu0
    %v556 = vadd.f32 %v471, %v555
    %v557 = vpop.f32.mrb[0].mxu0
    %v558 = vpop.f32.mrb[0].mxu0
    %v559 = vadd.f32 %v471, %v558
    %v560 = vpop.f32.mrb[0].mxu0
    %561 = vdwg.mxu0
    %v562 = vpack.c.bf16 %v559, %v556
    %v564 = vunpack.c.l.b16 %v562
    %v565 = vunpack.c.h.b16 %v562
    %v566 = vpack.c.b16 %v564, %v564
    %v567 = vpack.c.b16 %v565, %v565
    %570 = vst [vmem:[#allocation10] sm:$0xf] %v566
    %571 = vst [vmem:[#allocation10 + $0x4] sm:$0xf] %v567
    // Predicated region
    $region62: #{tpu_custom_call.1} parent=1 // pred_check
      _
    $region63: #{tpu_custom_call.1} parent=1 // pred_check_branch
      %573 = sbr.rel (0) target = $region65
    $region64: #{tpu_custom_call.1} parent=1 // pred_region
      %s575 = ssub.s32 128, 128
      %576 = vsyncadd [#allocation4], %s575
      %s577 = sshll.u32 [#allocation10], 4
      %s578 = int_to_ptr.vmem [resolvable:$true] %s577
      %583 = dma.vmem_to_hbm [thread:$0]  %s578, 128, %s11, [#allocation4], 64, 64, 4
    $region65: #{tpu_custom_call.1} parent=1 // pred_fallthru
      _
    // Predicated region
    $region66: #{tpu_custom_call.1} parent=1 // pred_check
      _
    $region67: #{tpu_custom_call.1} parent=1 // pred_check_branch
      %585 = sbr.rel (0) target = $region69
    $region68: #{tpu_custom_call.1} parent=1 // pred_region
      %586 = dma.done [#allocation4], 128
    $region69: #{tpu_custom_call.1} parent=1 // pred_fallthru
      _
    %587 = vsyncpa [#allocation3], 1
    %588 = vsyncpa [#allocation6], 1
    %589 = vsyncpa [#allocation9], 1
    %590 = vsyncpa [#allocation4], 1

</llo_original>
